<compile_context>
chip_gen: v7x
topology: tpu7x:2x2x1
jax: 0.10.0
libtpu: 0.0.40
codegen_flags: <defaults>
</compile_context>

<pallas_src>
import functools

import jax
import jax.numpy as jnp
import numpy as np
from jax.experimental import pallas as pl
from jax.experimental.pallas import tpu as pltpu

NEG_SLOPE = 0.2
IN_EPS = 1e-5


# ----------------------------------------------------------------------------
# Fused per-layer kernel: GEMM (conv-as-im2col) + bias + InstanceNorm + activation
# ----------------------------------------------------------------------------
def _fused_conv_layer_kernel(p_ref, w_ref, b_ref, o_ref, *, use_norm, act):
    """One conv layer for one batch element.

    p_ref: (1, K, HW)    im2col patches, pixels on lanes (K = C_in * 16)
    w_ref: (C_out, K)    conv weight, reshaped from (C_out, C_in, 4, 4)
    b_ref: (C_out, 1)    bias
    o_ref: (1, C_out, HW) lane-dense output
    """
    p = p_ref[0]                                   # (K, HW) f32
    w = w_ref[...]                                 # (C_out, K)

    # K and C_out are small; kernel is memory-bound, so jnp.dot is acceptable here.
    y = jnp.dot(w, p, preferred_element_type=jnp.float32) + b_ref[...]   # (C_out, HW)

    if use_norm:
        # InstanceNorm2d(affine=False): per (batch, channel) stats over all pixels,
        # biased variance, eps inside rsqrt -- matches PyTorch.
        mu = jnp.mean(y, axis=1, keepdims=True)
        var = jnp.mean((y - mu) ** 2, axis=1, keepdims=True)
        y = (y - mu) * jax.lax.rsqrt(var + IN_EPS)

    if act == "leaky":
        y = jnp.where(y >= 0, y, NEG_SLOPE * y)
    elif act == "sigmoid":
        y = jax.nn.sigmoid(y)

    o_ref[0] = y.astype(o_ref.dtype)


# ----------------------------------------------------------------------------
# One conv layer: reflect pad + im2col (XLA data movement) + fused Pallas kernel
# ----------------------------------------------------------------------------
def _conv_layer(x_bchw, w, b, *, stride, use_norm, act):
    """x_bchw: (B, C_in, H, W) f32 -> (B, C_out, H_out, W_out)."""
    B, C_in, H, W = x_bchw.shape
    C_out, _, k, _ = w.shape
    pad = 1

    # Reflect padding (channels-first layout preserved, no transpose).
    xp = jnp.pad(x_bchw, ((0, 0), (0, 0), (pad, pad), (pad, pad)), mode="reflect")
    Hp, Wp = H + 2 * pad, W + 2 * pad
    Ho = (Hp - k) // stride + 1
    Wo = (Wp - k) // stride + 1

    # im2col: stack the k*k strided taps -> (B, C_in*k*k, Ho*Wo), pixel axis last.
    # Tap ordering (c, kh, kw) matches torch weight.reshape(C_out, -1).
    taps = []
    for kh in range(k):
        for kw in range(k):
            t = jax.lax.slice(
                xp,
                (0, 0, kh, kw),
                (B, C_in, kh + stride * (Ho - 1) + 1, kw + stride * (Wo - 1) + 1),
                (1, 1, stride, stride),
            )                                              # (B, C_in, Ho, Wo)
            taps.append(t)
    patches = jnp.stack(taps, axis=2).reshape(B, C_in * k * k, Ho * Wo)

    K = C_in * k * k
    HW = Ho * Wo
    w2d = w.reshape(C_out, K).astype(jnp.float32)
    b2d = b.reshape(C_out, 1).astype(jnp.float32)

    kernel = functools.partial(_fused_conv_layer_kernel, use_norm=use_norm, act=act)

    out = pl.pallas_call(
        kernel,
        out_shape=jax.ShapeDtypeStruct((B, C_out, HW), jnp.float32),
        grid_spec=pltpu.PrefetchScalarGridSpec(
            num_scalar_prefetch=0,
            grid=(B,),
            in_specs=[
                pl.BlockSpec((1, K, HW), lambda bb: (bb, 0, 0)),
                pl.BlockSpec((C_out, K), lambda bb: (0, 0)),
                pl.BlockSpec((C_out, 1), lambda bb: (0, 0)),
            ],
            out_specs=pl.BlockSpec((1, C_out, HW), lambda bb: (bb, 0, 0)),
        ),
        compiler_params=pltpu.CompilerParams(
            dimension_semantics=("parallel",)),
    )(patches, w2d, b2d)

    return out.reshape(B, C_out, Ho, Wo)


# ----------------------------------------------------------------------------
# Full discriminator forward
# ----------------------------------------------------------------------------
def patchgan_discriminator(x_nchw, params, *, n_layers=3):
    """x_nchw: (B, Cin, H, W) f32. params: list of (w, b) per conv in order."""
    n_conv = n_layers + 2
    assert len(params) == n_conv
    h = x_nchw.astype(jnp.float32)
    for i, (w, b) in enumerate(params):
        stride = 2 if i <= n_layers - 1 else 1          # first conv + (n_layers-1) blocks
        use_norm = 1 <= i <= n_layers                   # every PatchBlock has InstanceNorm
        act = "sigmoid" if i == n_conv - 1 else "leaky"
        h = _conv_layer(h, w, b, stride=stride, use_norm=use_norm, act=act)
    return h


def init_params(key, in_channels=3, channels=8, n_layers=3):
    """Deterministic synthetic parameters in PyTorch Conv2d layout (Cout, Cin, 4, 4)."""
    chans = [in_channels, channels]
    for m in range(n_layers - 1):
        chans.append(channels * 2 ** (m + 1))
    chans.append(channels * 2 ** n_layers)
    chans.append(1)
    params = []
    keys = jax.random.split(key, len(chans) - 1)
    for i in range(len(chans) - 1):
        cin, cout = chans[i], chans[i + 1]
        kw_, kb_ = jax.random.split(keys[i])
        wscale = 1.0 / float(np.sqrt(cin * 16))
        w = jax.random.normal(kw_, (cout, cin, 4, 4), jnp.float32) * wscale
        b = jax.random.normal(kb_, (cout,), jnp.float32) * 0.05
        params.append((w, b))
    return params


# ----------------------------------------------------------------------------
# Pure-JAX (XLA) reference for correctness checking
# ----------------------------------------------------------------------------
def _reference_forward(x, params, n_layers=3):
    n_conv = n_layers + 2
    h = x.astype(jnp.float32)
    for i, (w, b) in enumerate(params):
        stride = 2 if i <= n_layers - 1 else 1
        hp = jnp.pad(h, ((0, 0), (0, 0), (1, 1), (1, 1)), mode="reflect")
        h = jax.lax.conv_general_dilated(
            hp, w, window_strides=(stride, stride), padding="VALID",
            dimension_numbers=("NCHW", "OIHW", "NCHW"),
            precision=jax.lax.Precision.HIGHEST,
        ) + b.reshape(1, -1, 1, 1)
        if 1 <= i <= n_layers:
            mu = jnp.mean(h, axis=(2, 3), keepdims=True)
            var = jnp.mean((h - mu) ** 2, axis=(2, 3), keepdims=True)
            h = (h - mu) * jax.lax.rsqrt(var + IN_EPS)
        if i == n_conv - 1:
            h = jax.nn.sigmoid(h)
        else:
            h = jnp.where(h >= 0, h, NEG_SLOPE * h)
    return h


if __name__ == "__main__":
    key = jax.random.PRNGKey(0)
    k_x, k_p = jax.random.split(key)

    B, Cin, H, W = 2, 3, 32, 32
    channels, n_layers = 8, 3

    x = jax.random.normal(k_x, (B, Cin, H, W), jnp.float32)
    params = init_params(k_p, in_channels=Cin, channels=channels, n_layers=n_layers)

    fwd = jax.jit(functools.partial(patchgan_discriminator, n_layers=n_layers))
    y = fwd(x, params)
    jax.block_until_ready(y)

    # 32 -> 16 -> 8 -> 4 -> 3 -> 2 spatially, 1 output channel.
    assert y.shape == (B, 1, 2, 2), y.shape
    assert bool(jnp.all(jnp.isfinite(y)))
    assert bool(jnp.all((y >= 0.0) & (y <= 1.0)))

    # Correctness vs. a pure-XLA reference of the same module.
    y_ref = _reference_forward(x, params, n_layers=n_layers)
    np.testing.assert_allclose(np.asarray(y), np.asarray(y_ref), rtol=2e-3, atol=2e-3)

    print("KERNEL_OK")
</pallas_src>

<mosaic_0001>
module attributes {stable_mosaic.version = 11 : i64} {
  func.func @_fused_conv_layer_kernel(%arg0: i32, %arg1: memref<1x48x256xf32, #tpu.memory_space<vmem>>, %arg2: memref<8x48xf32, #tpu.memory_space<vmem>>, %arg3: memref<8x1xf32, #tpu.memory_space<vmem>>, %arg4: memref<1x8x256xf32, #tpu.memory_space<vmem>>) attributes {dimension_semantics = [#tpu.dimension_semantics<parallel>], iteration_bounds = array<i64: 2>, scalar_prefetch = 0 : i64, scratch_operands = 0 : i64, tpu.core_type = #tpu.core_type<tc>, window_params = [{transform_indices = @transform_0, window_bounds = array<i64: 1, 48, 256>}, {pipeline_mode = #tpu.pipeline_mode<synchronous>, transform_indices = @transform_1, window_bounds = array<i64: 8, 48>}, {pipeline_mode = #tpu.pipeline_mode<synchronous>, transform_indices = @transform_2, window_bounds = array<i64: 8, 1>}, {transform_indices = @transform_3, window_bounds = array<i64: 1, 8, 256>}]} {
    %c0 = arith.constant 0 : index
    %c0_0 = arith.constant 0 : index
    %c0_1 = arith.constant 0 : index
    %0 = vector.load %arg1[%c0, %c0_0, %c0_1] : memref<1x48x256xf32, #tpu.memory_space<vmem>>, vector<1x48x256xf32>
    %1 = vector.shape_cast %0 : vector<1x48x256xf32> to vector<48x256xf32>
    %c0_2 = arith.constant 0 : index
    %c0_3 = arith.constant 0 : index
    %2 = vector.load %arg2[%c0_2, %c0_3] : memref<8x48xf32, #tpu.memory_space<vmem>>, vector<8x48xf32>
    %cst = arith.constant dense<0.000000e+00> : vector<8x256xf32>
    %3 = tpu.matmul %2, %1, %cst {dimension_numbers = #tpu.dot_dimension_numbers<[1], [0], [0], [1], [0, 0, 1, 1], [], []>} : vector<8x48xf32>, vector<48x256xf32>, vector<8x256xf32> -> vector<8x256xf32>
    %c0_4 = arith.constant 0 : index
    %c0_5 = arith.constant 0 : index
    %4 = vector.load %arg3[%c0_4, %c0_5] : memref<8x1xf32, #tpu.memory_space<vmem>>, vector<8x1xf32>
    %5 = vector.broadcast %4 : vector<8x1xf32> to vector<8x256xf32>
    %6 = arith.addf %3, %5 : vector<8x256xf32>
    %cst_6 = arith.constant 0.000000e+00 : f32
    %7 = vector.broadcast %cst_6 : f32 to vector<8x256xf32>
    %8 = arith.cmpf oge, %6, %7 : vector<8x256xf32>
    %cst_7 = arith.constant 2.000000e-01 : f32
    %9 = vector.broadcast %cst_7 : f32 to vector<8x256xf32>
    %10 = arith.mulf %9, %6 : vector<8x256xf32>
    %11 = arith.select %8, %6, %10 : vector<8x256xi1>, vector<8x256xf32>
    %c0_8 = arith.constant 0 : index
    %c0_9 = arith.constant 0 : index
    %c0_10 = arith.constant 0 : index
    %12 = vector.load %arg4[%c0_8, %c0_9, %c0_10] : memref<1x8x256xf32, #tpu.memory_space<vmem>>, vector<1x8x256xf32>
    %13 = vector.shape_cast %12 : vector<1x8x256xf32> to vector<8x256xf32>
    %14 = vector.shape_cast %11 : vector<8x256xf32> to vector<1x8x256xf32>
    tpu.vector_store %arg4[%c0_8, %c0_9, %c0_10], %14 {strides = array<i32>} : memref<1x8x256xf32, #tpu.memory_space<vmem>>, vector<1x8x256xf32>,
    return
  }
  func.func @transform_0(%arg0: i32) -> (i32, i32, i32) {
    %c0_i32 = arith.constant 0 : i32
    %c0_i32_0 = arith.constant 0 : i32
    %c0_i32_1 = arith.constant 0 : i32
    return %arg0, %c0_i32, %c0_i32_0 : i32, i32, i32
  }
  func.func @transform_1(%arg0: i32) -> (i32, i32) {
    %c0_i32 = arith.constant 0 : i32
    %c0_i32_0 = arith.constant 0 : i32
    %c0_i32_1 = arith.constant 0 : i32
    return %c0_i32, %c0_i32_0 : i32, i32
  }
  func.func @transform_2(%arg0: i32) -> (i32, i32) {
    %c0_i32 = arith.constant 0 : i32
    %c0_i32_0 = arith.constant 0 : i32
    %c0_i32_1 = arith.constant 0 : i32
    return %c0_i32, %c0_i32_0 : i32, i32
  }
  func.func @transform_3(%arg0: i32) -> (i32, i32, i32) {
    %c0_i32 = arith.constant 0 : i32
    %c0_i32_0 = arith.constant 0 : i32
    %c0_i32_1 = arith.constant 0 : i32
    return %arg0, %c0_i32, %c0_i32_0 : i32, i32, i32
  }
}

module attributes {stable_mosaic.version = 11 : i64} {
  func.func @_fused_conv_layer_kernel(%arg0: i32, %arg1: memref<1x128x64xf32, #tpu.memory_space<vmem>>, %arg2: memref<16x128xf32, #tpu.memory_space<vmem>>, %arg3: memref<16x1xf32, #tpu.memory_space<vmem>>, %arg4: memref<1x16x64xf32, #tpu.memory_space<vmem>>) attributes {dimension_semantics = [#tpu.dimension_semantics<parallel>], iteration_bounds = array<i64: 2>, scalar_prefetch = 0 : i64, scratch_operands = 0 : i64, tpu.core_type = #tpu.core_type<tc>, window_params = [{transform_indices = @transform_0, window_bounds = array<i64: 1, 128, 64>}, {pipeline_mode = #tpu.pipeline_mode<synchronous>, transform_indices = @transform_1, window_bounds = array<i64: 16, 128>}, {pipeline_mode = #tpu.pipeline_mode<synchronous>, transform_indices = @transform_2, window_bounds = array<i64: 16, 1>}, {transform_indices = @transform_3, window_bounds = array<i64: 1, 16, 64>}]} {
    %c0 = arith.constant 0 : index
    %c0_0 = arith.constant 0 : index
    %c0_1 = arith.constant 0 : index
    %0 = vector.load %arg1[%c0, %c0_0, %c0_1] : memref<1x128x64xf32, #tpu.memory_space<vmem>>, vector<1x128x64xf32>
    %1 = vector.shape_cast %0 : vector<1x128x64xf32> to vector<128x64xf32>
    %c0_2 = arith.constant 0 : index
    %c0_3 = arith.constant 0 : index
    %2 = vector.load %arg2[%c0_2, %c0_3] : memref<16x128xf32, #tpu.memory_space<vmem>>, vector<16x128xf32>
    %cst = arith.constant dense<0.000000e+00> : vector<16x64xf32>
    %3 = tpu.matmul %2, %1, %cst {dimension_numbers = #tpu.dot_dimension_numbers<[1], [0], [0], [1], [0, 0, 1, 1], [], []>} : vector<16x128xf32>, vector<128x64xf32>, vector<16x64xf32> -> vector<16x64xf32>
    %c0_4 = arith.constant 0 : index
    %c0_5 = arith.constant 0 : index
    %4 = vector.load %arg3[%c0_4, %c0_5] : memref<16x1xf32, #tpu.memory_space<vmem>>, vector<16x1xf32>
    %5 = vector.broadcast %4 : vector<16x1xf32> to vector<16x64xf32>
    %6 = arith.addf %3, %5 : vector<16x64xf32>
    %cst_6 = arith.constant dense<0.000000e+00> : vector<16xf32>
    %7 = vector.multi_reduction <add>, %6, %cst_6 [1] : vector<16x64xf32> to vector<16xf32>
    %8 = vector.shape_cast %7 : vector<16xf32> to vector<16x1xf32>
    %cst_7 = arith.constant 6.400000e+01 : f32
    %9 = vector.broadcast %cst_7 : f32 to vector<16x1xf32>
    %10 = arith.divf %8, %9 : vector<16x1xf32>
    %11 = vector.broadcast %10 : vector<16x1xf32> to vector<16x64xf32>
    %12 = arith.subf %6, %11 : vector<16x64xf32>
    %13 = arith.mulf %12, %12 : vector<16x64xf32>
    %cst_8 = arith.constant dense<0.000000e+00> : vector<16xf32>
    %14 = vector.multi_reduction <add>, %13, %cst_8 [1] : vector<16x64xf32> to vector<16xf32>
    %15 = vector.shape_cast %14 : vector<16xf32> to vector<16x1xf32>
    %cst_9 = arith.constant 6.400000e+01 : f32
    %16 = vector.broadcast %cst_9 : f32 to vector<16x1xf32>
    %17 = arith.divf %15, %16 : vector<16x1xf32>
    %18 = vector.broadcast %10 : vector<16x1xf32> to vector<16x64xf32>
    %19 = arith.subf %6, %18 : vector<16x64xf32>
    %cst_10 = arith.constant 9.99999974E-6 : f32
    %20 = vector.broadcast %cst_10 : f32 to vector<16x1xf32>
    %21 = arith.addf %17, %20 : vector<16x1xf32>
    %22 = math.rsqrt %21 : vector<16x1xf32>
    %23 = vector.broadcast %22 : vector<16x1xf32> to vector<16x64xf32>
    %24 = arith.mulf %19, %23 : vector<16x64xf32>
    %cst_11 = arith.constant 0.000000e+00 : f32
    %25 = vector.broadcast %cst_11 : f32 to vector<16x64xf32>
    %26 = arith.cmpf oge, %24, %25 : vector<16x64xf32>
    %cst_12 = arith.constant 2.000000e-01 : f32
    %27 = vector.broadcast %cst_12 : f32 to vector<16x64xf32>
    %28 = arith.mulf %27, %24 : vector<16x64xf32>
    %29 = arith.select %26, %24, %28 : vector<16x64xi1>, vector<16x64xf32>
    %c0_13 = arith.constant 0 : index
    %c0_14 = arith.constant 0 : index
    %c0_15 = arith.constant 0 : index
    %30 = vector.load %arg4[%c0_13, %c0_14, %c0_15] : memref<1x16x64xf32, #tpu.memory_space<vmem>>, vector<1x16x64xf32>
    %31 = vector.shape_cast %30 : vector<1x16x64xf32> to vector<16x64xf32>
    %32 = vector.shape_cast %29 : vector<16x64xf32> to vector<1x16x64xf32>
    tpu.vector_store %arg4[%c0_13, %c0_14, %c0_15], %32 {strides = array<i32>} : memref<1x16x64xf32, #tpu.memory_space<vmem>>, vector<1x16x64xf32>,
    return
  }
  func.func @transform_0(%arg0: i32) -> (i32, i32, i32) {
    %c0_i32 = arith.constant 0 : i32
    %c0_i32_0 = arith.constant 0 : i32
    %c0_i32_1 = arith.constant 0 : i32
    return %arg0, %c0_i32, %c0_i32_0 : i32, i32, i32
  }
  func.func @transform_1(%arg0: i32) -> (i32, i32) {
    %c0_i32 = arith.constant 0 : i32
    %c0_i32_0 = arith.constant 0 : i32
    %c0_i32_1 = arith.constant 0 : i32
    return %c0_i32, %c0_i32_0 : i32, i32
  }
  func.func @transform_2(%arg0: i32) -> (i32, i32) {
    %c0_i32 = arith.constant 0 : i32
    %c0_i32_0 = arith.constant 0 : i32
    %c0_i32_1 = arith.constant 0 : i32
    return %c0_i32, %c0_i32_0 : i32, i32
  }
  func.func @transform_3(%arg0: i32) -> (i32, i32, i32) {
    %c0_i32 = arith.constant 0 : i32
    %c0_i32_0 = arith.constant 0 : i32
    %c0_i32_1 = arith.constant 0 : i32
    return %arg0, %c0_i32, %c0_i32_0 : i32, i32, i32
  }
}

module attributes {stable_mosaic.version = 11 : i64} {
  func.func @_fused_conv_layer_kernel(%arg0: i32, %arg1: memref<1x256x16xf32, #tpu.memory_space<vmem>>, %arg2: memref<32x256xf32, #tpu.memory_space<vmem>>, %arg3: memref<32x1xf32, #tpu.memory_space<vmem>>, %arg4: memref<1x32x16xf32, #tpu.memory_space<vmem>>) attributes {dimension_semantics = [#tpu.dimension_semantics<parallel>], iteration_bounds = array<i64: 2>, scalar_prefetch = 0 : i64, scratch_operands = 0 : i64, tpu.core_type = #tpu.core_type<tc>, window_params = [{transform_indices = @transform_0, window_bounds = array<i64: 1, 256, 16>}, {pipeline_mode = #tpu.pipeline_mode<synchronous>, transform_indices = @transform_1, window_bounds = array<i64: 32, 256>}, {pipeline_mode = #tpu.pipeline_mode<synchronous>, transform_indices = @transform_2, window_bounds = array<i64: 32, 1>}, {transform_indices = @transform_3, window_bounds = array<i64: 1, 32, 16>}]} {
    %c0 = arith.constant 0 : index
    %c0_0 = arith.constant 0 : index
    %c0_1 = arith.constant 0 : index
    %0 = vector.load %arg1[%c0, %c0_0, %c0_1] : memref<1x256x16xf32, #tpu.memory_space<vmem>>, vector<1x256x16xf32>
    %1 = vector.shape_cast %0 : vector<1x256x16xf32> to vector<256x16xf32>
    %c0_2 = arith.constant 0 : index
    %c0_3 = arith.constant 0 : index
    %2 = vector.load %arg2[%c0_2, %c0_3] : memref<32x256xf32, #tpu.memory_space<vmem>>, vector<32x256xf32>
    %cst = arith.constant dense<0.000000e+00> : vector<32x16xf32>
    %3 = tpu.matmul %2, %1, %cst {dimension_numbers = #tpu.dot_dimension_numbers<[1], [0], [0], [1], [0, 0, 1, 1], [], []>} : vector<32x256xf32>, vector<256x16xf32>, vector<32x16xf32> -> vector<32x16xf32>
    %c0_4 = arith.constant 0 : index
    %c0_5 = arith.constant 0 : index
    %4 = vector.load %arg3[%c0_4, %c0_5] : memref<32x1xf32, #tpu.memory_space<vmem>>, vector<32x1xf32>
    %5 = vector.broadcast %4 : vector<32x1xf32> to vector<32x16xf32>
    %6 = arith.addf %3, %5 : vector<32x16xf32>
    %cst_6 = arith.constant dense<0.000000e+00> : vector<32xf32>
    %7 = vector.multi_reduction <add>, %6, %cst_6 [1] : vector<32x16xf32> to vector<32xf32>
    %8 = vector.shape_cast %7 : vector<32xf32> to vector<32x1xf32>
    %cst_7 = arith.constant 1.600000e+01 : f32
    %9 = vector.broadcast %cst_7 : f32 to vector<32x1xf32>
    %10 = arith.divf %8, %9 : vector<32x1xf32>
    %11 = vector.broadcast %10 : vector<32x1xf32> to vector<32x16xf32>
    %12 = arith.subf %6, %11 : vector<32x16xf32>
    %13 = arith.mulf %12, %12 : vector<32x16xf32>
    %cst_8 = arith.constant dense<0.000000e+00> : vector<32xf32>
    %14 = vector.multi_reduction <add>, %13, %cst_8 [1] : vector<32x16xf32> to vector<32xf32>
    %15 = vector.shape_cast %14 : vector<32xf32> to vector<32x1xf32>
    %cst_9 = arith.constant 1.600000e+01 : f32
    %16 = vector.broadcast %cst_9 : f32 to vector<32x1xf32>
    %17 = arith.divf %15, %16 : vector<32x1xf32>
    %18 = vector.broadcast %10 : vector<32x1xf32> to vector<32x16xf32>
    %19 = arith.subf %6, %18 : vector<32x16xf32>
    %cst_10 = arith.constant 9.99999974E-6 : f32
    %20 = vector.broadcast %cst_10 : f32 to vector<32x1xf32>
    %21 = arith.addf %17, %20 : vector<32x1xf32>
    %22 = math.rsqrt %21 : vector<32x1xf32>
    %23 = vector.broadcast %22 : vector<32x1xf32> to vector<32x16xf32>
    %24 = arith.mulf %19, %23 : vector<32x16xf32>
    %cst_11 = arith.constant 0.000000e+00 : f32
    %25 = vector.broadcast %cst_11 : f32 to vector<32x16xf32>
    %26 = arith.cmpf oge, %24, %25 : vector<32x16xf32>
    %cst_12 = arith.constant 2.000000e-01 : f32
    %27 = vector.broadcast %cst_12 : f32 to vector<32x16xf32>
    %28 = arith.mulf %27, %24 : vector<32x16xf32>
    %29 = arith.select %26, %24, %28 : vector<32x16xi1>, vector<32x16xf32>
    %c0_13 = arith.constant 0 : index
    %c0_14 = arith.constant 0 : index
    %c0_15 = arith.constant 0 : index
    %30 = vector.load %arg4[%c0_13, %c0_14, %c0_15] : memref<1x32x16xf32, #tpu.memory_space<vmem>>, vector<1x32x16xf32>
    %31 = vector.shape_cast %30 : vector<1x32x16xf32> to vector<32x16xf32>
    %32 = vector.shape_cast %29 : vector<32x16xf32> to vector<1x32x16xf32>
    tpu.vector_store %arg4[%c0_13, %c0_14, %c0_15], %32 {strides = array<i32>} : memref<1x32x16xf32, #tpu.memory_space<vmem>>, vector<1x32x16xf32>,
    return
  }
  func.func @transform_0(%arg0: i32) -> (i32, i32, i32) {
    %c0_i32 = arith.constant 0 : i32
    %c0_i32_0 = arith.constant 0 : i32
    %c0_i32_1 = arith.constant 0 : i32
    return %arg0, %c0_i32, %c0_i32_0 : i32, i32, i32
  }
  func.func @transform_1(%arg0: i32) -> (i32, i32) {
    %c0_i32 = arith.constant 0 : i32
    %c0_i32_0 = arith.constant 0 : i32
    %c0_i32_1 = arith.constant 0 : i32
    return %c0_i32, %c0_i32_0 : i32, i32
  }
  func.func @transform_2(%arg0: i32) -> (i32, i32) {
    %c0_i32 = arith.constant 0 : i32
    %c0_i32_0 = arith.constant 0 : i32
    %c0_i32_1 = arith.constant 0 : i32
    return %c0_i32, %c0_i32_0 : i32, i32
  }
  func.func @transform_3(%arg0: i32) -> (i32, i32, i32) {
    %c0_i32 = arith.constant 0 : i32
    %c0_i32_0 = arith.constant 0 : i32
    %c0_i32_1 = arith.constant 0 : i32
    return %arg0, %c0_i32, %c0_i32_0 : i32, i32, i32
  }
}

module attributes {stable_mosaic.version = 11 : i64} {
  func.func @_fused_conv_layer_kernel(%arg0: i32, %arg1: memref<1x512x9xf32, #tpu.memory_space<vmem>>, %arg2: memref<64x512xf32, #tpu.memory_space<vmem>>, %arg3: memref<64x1xf32, #tpu.memory_space<vmem>>, %arg4: memref<1x64x9xf32, #tpu.memory_space<vmem>>) attributes {dimension_semantics = [#tpu.dimension_semantics<parallel>], iteration_bounds = array<i64: 2>, scalar_prefetch = 0 : i64, scratch_operands = 0 : i64, tpu.core_type = #tpu.core_type<tc>, window_params = [{transform_indices = @transform_0, window_bounds = array<i64: 1, 512, 9>}, {pipeline_mode = #tpu.pipeline_mode<synchronous>, transform_indices = @transform_1, window_bounds = array<i64: 64, 512>}, {pipeline_mode = #tpu.pipeline_mode<synchronous>, transform_indices = @transform_2, window_bounds = array<i64: 64, 1>}, {transform_indices = @transform_3, window_bounds = array<i64: 1, 64, 9>}]} {
    %c0 = arith.constant 0 : index
    %c0_0 = arith.constant 0 : index
    %c0_1 = arith.constant 0 : index
    %0 = vector.load %arg1[%c0, %c0_0, %c0_1] : memref<1x512x9xf32, #tpu.memory_space<vmem>>, vector<1x512x9xf32>
    %1 = vector.shape_cast %0 : vector<1x512x9xf32> to vector<512x9xf32>
    %c0_2 = arith.constant 0 : index
    %c0_3 = arith.constant 0 : index
    %2 = vector.load %arg2[%c0_2, %c0_3] : memref<64x512xf32, #tpu.memory_space<vmem>>, vector<64x512xf32>
    %cst = arith.constant dense<0.000000e+00> : vector<64x9xf32>
    %3 = tpu.matmul %2, %1, %cst {dimension_numbers = #tpu.dot_dimension_numbers<[1], [0], [0], [1], [0, 0, 1, 1], [], []>} : vector<64x512xf32>, vector<512x9xf32>, vector<64x9xf32> -> vector<64x9xf32>
    %c0_4 = arith.constant 0 : index
    %c0_5 = arith.constant 0 : index
    %4 = vector.load %arg3[%c0_4, %c0_5] : memref<64x1xf32, #tpu.memory_space<vmem>>, vector<64x1xf32>
    %5 = vector.broadcast %4 : vector<64x1xf32> to vector<64x9xf32>
    %6 = arith.addf %3, %5 : vector<64x9xf32>
    %cst_6 = arith.constant dense<0.000000e+00> : vector<64xf32>
    %7 = vector.multi_reduction <add>, %6, %cst_6 [1] : vector<64x9xf32> to vector<64xf32>
    %8 = vector.shape_cast %7 : vector<64xf32> to vector<64x1xf32>
    %cst_7 = arith.constant 9.000000e+00 : f32
    %9 = vector.broadcast %cst_7 : f32 to vector<64x1xf32>
    %10 = arith.divf %8, %9 : vector<64x1xf32>
    %11 = vector.broadcast %10 : vector<64x1xf32> to vector<64x9xf32>
    %12 = arith.subf %6, %11 : vector<64x9xf32>
    %13 = arith.mulf %12, %12 : vector<64x9xf32>
    %cst_8 = arith.constant dense<0.000000e+00> : vector<64xf32>
    %14 = vector.multi_reduction <add>, %13, %cst_8 [1] : vector<64x9xf32> to vector<64xf32>
    %15 = vector.shape_cast %14 : vector<64xf32> to vector<64x1xf32>
    %cst_9 = arith.constant 9.000000e+00 : f32
    %16 = vector.broadcast %cst_9 : f32 to vector<64x1xf32>
    %17 = arith.divf %15, %16 : vector<64x1xf32>
    %18 = vector.broadcast %10 : vector<64x1xf32> to vector<64x9xf32>
    %19 = arith.subf %6, %18 : vector<64x9xf32>
    %cst_10 = arith.constant 9.99999974E-6 : f32
    %20 = vector.broadcast %cst_10 : f32 to vector<64x1xf32>
    %21 = arith.addf %17, %20 : vector<64x1xf32>
    %22 = math.rsqrt %21 : vector<64x1xf32>
    %23 = vector.broadcast %22 : vector<64x1xf32> to vector<64x9xf32>
    %24 = arith.mulf %19, %23 : vector<64x9xf32>
    %cst_11 = arith.constant 0.000000e+00 : f32
    %25 = vector.broadcast %cst_11 : f32 to vector<64x9xf32>
    %26 = arith.cmpf oge, %24, %25 : vector<64x9xf32>
    %cst_12 = arith.constant 2.000000e-01 : f32
    %27 = vector.broadcast %cst_12 : f32 to vector<64x9xf32>
    %28 = arith.mulf %27, %24 : vector<64x9xf32>
    %29 = arith.select %26, %24, %28 : vector<64x9xi1>, vector<64x9xf32>
    %c0_13 = arith.constant 0 : index
    %c0_14 = arith.constant 0 : index
    %c0_15 = arith.constant 0 : index
    %30 = vector.load %arg4[%c0_13, %c0_14, %c0_15] : memref<1x64x9xf32, #tpu.memory_space<vmem>>, vector<1x64x9xf32>
    %31 = vector.shape_cast %30 : vector<1x64x9xf32> to vector<64x9xf32>
    %32 = vector.shape_cast %29 : vector<64x9xf32> to vector<1x64x9xf32>
    tpu.vector_store %arg4[%c0_13, %c0_14, %c0_15], %32 {strides = array<i32>} : memref<1x64x9xf32, #tpu.memory_space<vmem>>, vector<1x64x9xf32>,
    return
  }
  func.func @transform_0(%arg0: i32) -> (i32, i32, i32) {
    %c0_i32 = arith.constant 0 : i32
    %c0_i32_0 = arith.constant 0 : i32
    %c0_i32_1 = arith.constant 0 : i32
    return %arg0, %c0_i32, %c0_i32_0 : i32, i32, i32
  }
  func.func @transform_1(%arg0: i32) -> (i32, i32) {
    %c0_i32 = arith.constant 0 : i32
    %c0_i32_0 = arith.constant 0 : i32
    %c0_i32_1 = arith.constant 0 : i32
    return %c0_i32, %c0_i32_0 : i32, i32
  }
  func.func @transform_2(%arg0: i32) -> (i32, i32) {
    %c0_i32 = arith.constant 0 : i32
    %c0_i32_0 = arith.constant 0 : i32
    %c0_i32_1 = arith.constant 0 : i32
    return %c0_i32, %c0_i32_0 : i32, i32
  }
  func.func @transform_3(%arg0: i32) -> (i32, i32, i32) {
    %c0_i32 = arith.constant 0 : i32
    %c0_i32_0 = arith.constant 0 : i32
    %c0_i32_1 = arith.constant 0 : i32
    return %arg0, %c0_i32, %c0_i32_0 : i32, i32, i32
  }
}

module attributes {stable_mosaic.version = 11 : i64} {
  func.func @_fused_conv_layer_kernel(%arg0: i32, %arg1: memref<1x1024x4xf32, #tpu.memory_space<vmem>>, %arg2: memref<1x1024xf32, #tpu.memory_space<vmem>>, %arg3: memref<1x1xf32, #tpu.memory_space<vmem>>, %arg4: memref<1x1x4xf32, #tpu.memory_space<vmem>>) attributes {dimension_semantics = [#tpu.dimension_semantics<parallel>], iteration_bounds = array<i64: 2>, scalar_prefetch = 0 : i64, scratch_operands = 0 : i64, tpu.core_type = #tpu.core_type<tc>, window_params = [{transform_indices = @transform_0, window_bounds = array<i64: 1, 1024, 4>}, {pipeline_mode = #tpu.pipeline_mode<synchronous>, transform_indices = @transform_1, window_bounds = array<i64: 1, 1024>}, {pipeline_mode = #tpu.pipeline_mode<synchronous>, transform_indices = @transform_2, window_bounds = array<i64: 1, 1>}, {transform_indices = @transform_3, window_bounds = array<i64: 1, 1, 4>}]} {
    %c0 = arith.constant 0 : index
    %c0_0 = arith.constant 0 : index
    %c0_1 = arith.constant 0 : index
    %0 = vector.load %arg1[%c0, %c0_0, %c0_1] : memref<1x1024x4xf32, #tpu.memory_space<vmem>>, vector<1x1024x4xf32>
    %1 = vector.shape_cast %0 : vector<1x1024x4xf32> to vector<1024x4xf32>
    %c0_2 = arith.constant 0 : index
    %c0_3 = arith.constant 0 : index
    %2 = vector.load %arg2[%c0_2, %c0_3] : memref<1x1024xf32, #tpu.memory_space<vmem>>, vector<1x1024xf32>
    %cst = arith.constant dense<0.000000e+00> : vector<1x4xf32>
    %3 = tpu.matmul %2, %1, %cst {dimension_numbers = #tpu.dot_dimension_numbers<[1], [0], [0], [1], [0, 0, 1, 1], [], []>} : vector<1x1024xf32>, vector<1024x4xf32>, vector<1x4xf32> -> vector<1x4xf32>
    %c0_4 = arith.constant 0 : index
    %c0_5 = arith.constant 0 : index
    %4 = vector.load %arg3[%c0_4, %c0_5] : memref<1x1xf32, #tpu.memory_space<vmem>>, vector<1x1xf32>
    %5 = vector.broadcast %4 : vector<1x1xf32> to vector<1x4xf32>
    %6 = arith.addf %3, %5 : vector<1x4xf32>
    %7 = arith.negf %6 : vector<1x4xf32>
    %8 = math.exp %7 : vector<1x4xf32>
    %cst_6 = arith.constant 1.000000e+00 : f32
    %9 = vector.broadcast %cst_6 : f32 to vector<1x4xf32>
    %10 = arith.addf %9, %8 : vector<1x4xf32>
    %11 = arith.divf %9, %10 : vector<1x4xf32>
    %c0_7 = arith.constant 0 : index
    %c0_8 = arith.constant 0 : index
    %c0_9 = arith.constant 0 : index
    %12 = vector.load %arg4[%c0_7, %c0_8, %c0_9] : memref<1x1x4xf32, #tpu.memory_space<vmem>>, vector<1x1x4xf32>
    %13 = vector.shape_cast %12 : vector<1x1x4xf32> to vector<1x4xf32>
    %14 = vector.shape_cast %11 : vector<1x4xf32> to vector<1x1x4xf32>
    tpu.vector_store %arg4[%c0_7, %c0_8, %c0_9], %14 {strides = array<i32>} : memref<1x1x4xf32, #tpu.memory_space<vmem>>, vector<1x1x4xf32>,
    return
  }
  func.func @transform_0(%arg0: i32) -> (i32, i32, i32) {
    %c0_i32 = arith.constant 0 : i32
    %c0_i32_0 = arith.constant 0 : i32
    %c0_i32_1 = arith.constant 0 : i32
    return %arg0, %c0_i32, %c0_i32_0 : i32, i32, i32
  }
  func.func @transform_1(%arg0: i32) -> (i32, i32) {
    %c0_i32 = arith.constant 0 : i32
    %c0_i32_0 = arith.constant 0 : i32
    %c0_i32_1 = arith.constant 0 : i32
    return %c0_i32, %c0_i32_0 : i32, i32
  }
  func.func @transform_2(%arg0: i32) -> (i32, i32) {
    %c0_i32 = arith.constant 0 : i32
    %c0_i32_0 = arith.constant 0 : i32
    %c0_i32_1 = arith.constant 0 : i32
    return %c0_i32, %c0_i32_0 : i32, i32
  }
  func.func @transform_3(%arg0: i32) -> (i32, i32, i32) {
    %c0_i32 = arith.constant 0 : i32
    %c0_i32_0 = arith.constant 0 : i32
    %c0_i32_1 = arith.constant 0 : i32
    return %arg0, %c0_i32, %c0_i32_0 : i32, i32, i32
  }
}

</mosaic_0001>

<llo_original>
// kernel: patchgan_discriminator.5
$region0: #{patchgan_discriminator.5}
  #allocation0 [shape = 'u32[]', space=smem, size = 0x4, offset = 0x4, fixed_abs, tag = 'smem constant byte address 0x4 - core index']
  #allocation1 [shape = 'u32[144,128]{1,0:T(1,128)}', space=vmem, size = 0x12000, scoped, tag = 'internal scratch']
  %s0 = inlined_call_operand.vmem [shape: f32[2,48,256], index: 0, kind: input, shape index: {}]
  %s1 = inlined_call_operand.vmem [shape: f32[8,48], index: 1, kind: input, shape index: {}]
  %s2 = inlined_call_operand.vmem [shape: f32[8,1], index: 2, kind: input, shape index: {}]
  %s3 = inlined_call_operand.vmem [shape: f32[2,8,256], index: 3, kind: output, shape index: {}]
  %s4 = sld [smem:[#allocation0]]
  $region45: #{patchgan_discriminator.5} parent=0
    _
  %s6 = ssub.s32 1, %s4
  %s7 = scalar_select 0, %s6, %s4
  loop: start=0, step=1, limit=4
  $region2: #{patchgan_discriminator.5} parent=0 // loop_pre_header
    _
  $region3: #{patchgan_discriminator.5} parent=0 // loop_header
    %s9 = sphi 0, %s13
    %p10 = scmp.ge.s32.totalorder %s9, 4
    %s19 = sphi 0, %s21
    %s22 = sphi 0, %s19
    %s23 = sphi 0, %s22
    %s39 = sphi 0, %s23
    %s43 = sphi 0, %s43
    %s45 = sphi 0, %s43
    %s46 = sphi 0, %s45
    %s60 = sphi 0, %s46
    %s64 = sphi 0, %s64
    %s66 = sphi 0, %s64
    %s67 = sphi 0, %s66
    %s81 = sphi 0, %s67
    %s87 = sphi 0, %s89
    %s90 = sphi 0, %s87
    %s91 = sphi 0, %s90
    %s107 = sphi 0, %s91
  $region4: #{patchgan_discriminator.5} parent=0 // loop_header_branch
    %12 = sbr.rel (%p10) target = $region8
  $region5: #{patchgan_discriminator.5} parent=0 // loop_body
    %s14 = ssub.s32 %s9, 1
    %s15 = ssub.s32 %s9, 2
    %s16 = sadd.s32 %s9, 1
    %s17 = ssub.s32 %s9, %s16
    %p18 = scmp.eq.s32.totalorder %s17, 0
    %s20 = sadd.s32 %s19, 1
    %s21 = scalar_select %p18, %s19, %s20
    %p24 = pneg %p18
    %p25 = scmp.eq.s32.totalorder %s9, 1
    %p26 = por %p24, %p25
    %p27 = scmp.ne.s32.totalorder %s19, %s22
    %p28 = scmp.eq.s32.totalorder %s9, 0
    %p29 = por %p27, %p28
    %p30 = scmp.ne.s32.totalorder %s19, %s22
    %p31 = scmp.eq.s32.totalorder %s14, 1
    %p32 = por %p30, %p31
    %p33 = scmp.ne.s32.totalorder %s22, %s23
    %p34 = scmp.eq.s32.totalorder %s14, 0
    %p35 = por %p33, %p34
    %p36 = scmp.ne.s32.totalorder %s22, %s23
    %p37 = scmp.eq.s32.totalorder %s15, 1
    %p38 = por %p36, %p37
    %p40 = scmp.ne.s32.totalorder %s23, %s39
    %p41 = scmp.eq.s32.totalorder %s15, 0
    %p42 = por %p40, %p41
    %s44 = sadd.s32 %s43, 1
    %p47 = scmp.eq.s32.totalorder %s9, 1
    %p48 = scmp.ne.s32.totalorder %s43, %s45
    %p49 = scmp.eq.s32.totalorder %s9, 0
    %p50 = por %p48, %p49
    %p51 = scmp.ne.s32.totalorder %s43, %s45
    %p52 = scmp.eq.s32.totalorder %s14, 1
    %p53 = por %p51, %p52
    %p54 = scmp.ne.s32.totalorder %s45, %s46
    %p55 = scmp.eq.s32.totalorder %s14, 0
    %p56 = por %p54, %p55
    %p57 = scmp.ne.s32.totalorder %s45, %s46
    %p58 = scmp.eq.s32.totalorder %s15, 1
    %p59 = por %p57, %p58
    %p61 = scmp.ne.s32.totalorder %s46, %s60
    %p62 = scmp.eq.s32.totalorder %s15, 0
    %p63 = por %p61, %p62
    %s65 = sadd.s32 %s64, 1
    %p68 = scmp.eq.s32.totalorder %s9, 1
    %p69 = scmp.ne.s32.totalorder %s64, %s66
    %p70 = scmp.eq.s32.totalorder %s9, 0
    %p71 = por %p69, %p70
    %p72 = scmp.ne.s32.totalorder %s64, %s66
    %p73 = scmp.eq.s32.totalorder %s14, 1
    %p74 = por %p72, %p73
    %p75 = scmp.ne.s32.totalorder %s66, %s67
    %p76 = scmp.eq.s32.totalorder %s14, 0
    %p77 = por %p75, %p76
    %p78 = scmp.ne.s32.totalorder %s66, %s67
    %p79 = scmp.eq.s32.totalorder %s15, 1
    %p80 = por %p78, %p79
    %p82 = scmp.ne.s32.totalorder %s67, %s81
    %p83 = scmp.eq.s32.totalorder %s15, 0
    %p84 = por %p82, %p83
    %s85 = ssub.s32 %s9, %s16
    %p86 = scmp.eq.s32.totalorder %s85, 0
    %s88 = sadd.s32 %s87, 1
    %s89 = scalar_select %p86, %s87, %s88
    %p92 = pneg %p86
    %p93 = scmp.eq.s32.totalorder %s9, 1
    %p94 = por %p92, %p93
    %p95 = scmp.ne.s32.totalorder %s87, %s90
    %p96 = scmp.eq.s32.totalorder %s9, 0
    %p97 = por %p95, %p96
    %p98 = scmp.ne.s32.totalorder %s87, %s90
    %p99 = scmp.eq.s32.totalorder %s14, 1
    %p100 = por %p98, %p99
    %p101 = scmp.ne.s32.totalorder %s90, %s91
    %p102 = scmp.eq.s32.totalorder %s14, 0
    %p103 = por %p101, %p102
    %p104 = scmp.ne.s32.totalorder %s90, %s91
    %p105 = scmp.eq.s32.totalorder %s15, 1
    %p106 = por %p104, %p105
    %p108 = scmp.ne.s32.totalorder %s91, %s107
    %p109 = scmp.eq.s32.totalorder %s15, 0
    %p110 = por %p108, %p109
    %p111 = scmp.le.s32.totalorder 1, %s9
    %p112 = scmp.lt.s32.totalorder %s9, 3
    %p113 = pnand %p111, %p112
    %p114 = pneg %p113
    // Predicated region
    $region9: #{patchgan_discriminator.5} parent=5 // pred_check
      _
    $region10: #{patchgan_discriminator.5} parent=5 // pred_check_branch
      %116 = sbr.rel (%p113) target = $region12
    $region11: #{patchgan_discriminator.5} parent=5 // pred_region
      %s117 = ssub.s32 %s9, 1
      // Predicated region
      $region13: #{patchgan_discriminator.5} parent=11 // pred_check
        %p118 = pneg %p56
      $region14: #{patchgan_discriminator.5} parent=11 // pred_check_branch
        %120 = sbr.rel (%p118) target = $region16
      $region15: #{patchgan_discriminator.5} parent=11 // pred_region
        _
      $region16: #{patchgan_discriminator.5} parent=11 // pred_fallthru
        _
      // Predicated region
      $region17: #{patchgan_discriminator.5} parent=11 // pred_check
        %p121 = pneg %p77
      $region18: #{patchgan_discriminator.5} parent=11 // pred_check_branch
        %123 = sbr.rel (%p121) target = $region20
      $region19: #{patchgan_discriminator.5} parent=11 // pred_region
        _
      $region20: #{patchgan_discriminator.5} parent=11 // pred_fallthru
        _
    $region12: #{patchgan_discriminator.5} parent=5 // pred_fallthru
      _
    %p124 = scmp.lt.s32.totalorder %s9, 2
    // Predicated region
    $region21: #{patchgan_discriminator.5} parent=5 // pred_check
      %p125 = pneg %p124
    $region22: #{patchgan_discriminator.5} parent=5 // pred_check_branch
      %127 = sbr.rel (%p125) target = $region24
    $region23: #{patchgan_discriminator.5} parent=5 // pred_region
      // Predicated region
      $region25: #{patchgan_discriminator.5} parent=23 // pred_check
        %p128 = pneg %p29
      $region26: #{patchgan_discriminator.5} parent=23 // pred_check_branch
        %130 = sbr.rel (%p128) target = $region28
      $region27: #{patchgan_discriminator.5} parent=23 // pred_region
        %p131 = scmp.lt.s32.totalorder %s9, 1
        %s132 = scalar_select %p131, %s9, 1
        %s133 = smul.addr %s132, 12
        %s134 = smul.addr %s133, 8
        %s135 = scalar_lea.vmem %s0, %s134
      $region28: #{patchgan_discriminator.5} parent=23 // pred_fallthru
        _
    $region24: #{patchgan_discriminator.5} parent=5 // pred_fallthru
      _
    %p136 = scmp.le.s32.totalorder 1, %s9
    %p137 = scmp.lt.s32.totalorder %s9, 3
    %p138 = pnand %p136, %p137
    %p139 = pneg %p138
    // Predicated region
    $region29: #{patchgan_discriminator.5} parent=5 // pred_check
      _
    $region30: #{patchgan_discriminator.5} parent=5 // pred_check_branch
      %141 = sbr.rel (%p138) target = $region32
    $region31: #{patchgan_discriminator.5} parent=5 // pred_region
      %s142 = ssub.s32 %s9, 1
      %p143 = scmp.lt.s32.totalorder %s14, 1
      %s144 = scalar_select %p143, %s14, 1
      %s145 = smul.addr %s144, 12
      %s146 = smul.addr %s145, 8
      %s147 = scalar_lea.vmem %s0, %s146
      %p148 = pneg %p35
      %p149 = pneg %p32
      %p150 = pneg %p56
      %p151 = pneg %p53
      %p152 = pneg %p77
      %p153 = pneg %p74
      %p154 = pneg %p103
      %p155 = pneg %p100
      %p156 = scmp.lt.s32.totalorder %s14, 1
      %s157 = scalar_select %p156, %s14, 1
      %s158 = smul.addr %s157, 2
      %s159 = smul.addr %s158, 8
      %s160 = scalar_lea.vmem %s3, %s159
      %p161 = scmp.lt.s32.totalorder %s14, 1
      %s162 = scalar_select %p161, %s14, 1
      %s163 = smul.addr %s162, 12
      %s164 = smul.addr %s163, 8
      %s165 = scalar_lea.vmem %s0, %s164
      %p166 = scmp.lt.s32.totalorder %s14, 1
      %s167 = scalar_select %p166, %s14, 1
      %s168 = smul.addr %s167, 2
      %s169 = smul.addr %s168, 8
      %s170 = scalar_lea.vmem %s3, %s169
      %v171 = vld [vmem:[%s165] sm:$0xff]
      %v172 = vld [vmem:[%s165 + $0x8] sm:$0xff]
      %v173 = vld [vmem:[%s165 + $0x10] sm:$0xff]
      %v174 = vld [vmem:[%s165 + $0x18] sm:$0xff]
      %v175 = vld [vmem:[%s165 + $0x20] sm:$0xff]
      %v176 = vld [vmem:[%s165 + $0x28] sm:$0xff]
      %v177 = vld [vmem:[%s165 + $0x30] sm:$0xff]
      %v178 = vld [vmem:[%s165 + $0x38] sm:$0xff]
      %v179 = vld [vmem:[%s165 + $0x40] sm:$0xff]
      %v180 = vld [vmem:[%s165 + $0x48] sm:$0xff]
      %v181 = vld [vmem:[%s165 + $0x50] sm:$0xff]
      %v182 = vld [vmem:[%s165 + $0x58] sm:$0xff]
      %v183 = vld [vmem:[%s1] sm:$0xff]
      %v184 = vld [vmem:[%s2] sm:$0xff]
      %186 = vset.pattern.permute.xlu0 0
      %187 = vperm.xlu0 %186, %v184
      %v188 = vpop.permute.xlu0 %187
      %vm190 = vcmask 392192
      %v192 = vsel %vm190, %v183, 0
      %194 = vmatprep.subr.mxu0 %v172
      %195 = vmatpush1.msra.mxu0 %v171
      %196 = vmatprep.subr.mxu0 %v174
      %197 = vmatpush1.msra.mxu0 %v173
      %198 = vmatprep.subr.mxu0 %v176
      %199 = vmatpush1.msra.mxu0 %v175
      %200 = vmatprep.subr.mxu0 %v178
      %201 = vmatpush1.msra.mxu0 %v177
      %202 = vmatprep.subr.mxu0 %v180
      %203 = vmatpush1.msra.mxu0 %v179
      %204 = vmatprep.subr.mxu0 %v182
      %205 = vmatpush1.msra.mxu0 %v181
      %206 = vmatprep.subr.mxu0 0.0
      %207 = vmatpush1.msra.mxu0 0.0
      %208 = vmatprep.subr.mxu0 0.0
      %209 = vmatpush1.msra.mxu0 0.0
      %210 = vmatprep.subr.mxu0 0.0
      %211 = vmatpush1.msra.mxu0 0.0
      %212 = vmatprep.subr.mxu0 0.0
      %213 = vmatpush1.msra.mxu0 0.0
      %214 = vmatprep.subr.mxu0 0.0
      %215 = vmatpush1.msra.mxu0 0.0
      %216 = vmatprep.subr.mxu0 0.0
      %217 = vmatpush1.msra.mxu0 0.0
      %218 = vmatprep.subr.mxu0 0.0
      %219 = vmatpush1.msra.mxu0 0.0
      %220 = vmatprep.subr.mxu0 0.0
      %221 = vmatpush1.msra.mxu0 0.0
      %222 = vmatprep.subr.mxu0 0.0
      %223 = vmatpush1.msra.mxu0 0.0
      %224 = vmatprep.subr.mxu0 0.0
      %225 = vmatpush1.msra.mxu0 0.0
      %226 = vmatprep.subr.mxu0 0.0
      %227 = vmatpush1.msra.mxu0 0.0
      %228 = vmatprep.subr.mxu0 0.0
      %229 = vmatpush1.msra.mxu0 0.0
      %230 = vmatprep.subr.mxu0 0.0
      %231 = vmatpush1.msra.mxu0 0.0
      %232 = vmatprep.subr.mxu0 0.0
      %233 = vmatpush1.msra.mxu0 0.0
      %234 = vmatprep.subr.mxu0 0.0
      %235 = vmatpush1.msra.mxu0 0.0
      %236 = vmatprep.subr.mxu0 0.0
      %237 = vmatpush1.msra.mxu0 0.0
      %238 = vmatprep.subr.mxu0 0.0
      %239 = vmatpush1.msra.mxu0 0.0
      %240 = vmatprep.subr.mxu0 0.0
      %241 = vmatpush1.msra.mxu0 0.0
      %242 = vmatprep.subr.mxu0 0.0
      %243 = vmatpush1.msra.mxu0 0.0
      %244 = vmatprep.subr.mxu0 0.0
      %245 = vmatpush1.msra.mxu0 0.0
      %246 = vmatprep.subr.mxu0 0.0
      %247 = vmatpush1.msra.mxu0 0.0
      %248 = vmatprep.subr.mxu0 0.0
      %249 = vmatpush1.msra.mxu0 0.0
      %250 = vmatprep.subr.mxu0 0.0
      %251 = vmatpush1.msra.mxu0 0.0
      %252 = vmatprep.subr.mxu0 0.0
      %253 = vmatpush1.msra.mxu0 0.0
      %254 = vmatprep.subr.mxu0 0.0
      %255 = vmatpush1.msra.mxu0 0.0
      %256 = vmatprep.subr.mxu0 0.0
      %257 = vmatpush1.msra.mxu0 0.0
      %258 = vmatprep.mubr.f32.mxu0 0.0
      %259 = vmatmul.mubr.f32.gmra.mrb[0].mxu0 %v192
      %v260 = vpop.f32.mrb[0].mxu0
      %v261 = vadd.f32 %v188, %v260
      %v262 = vpop.f32.mrb[0].mxu0
      %v263 = vadd.f32 %v188, %v262
      %264 = vdwg.mxu0
      %vm265 = vcmp.ge.f32.partialorder %v261, 0.0
      %vm266 = vcmp.ge.f32.partialorder %v263, 0.0
      %v267 = vmul.f32 %v261, 0.2
      %v268 = vmul.f32 %v263, 0.2
      %v269 = vsel %vm265, %v261, %v267
      %v270 = vsel %vm266, %v263, %v268
      %271 = vst [vmem:[%s170] sm:$0xff] %v269
      %272 = vst [vmem:[%s170 + $0x8] sm:$0xff] %v270
      %p273 = scmp.lt.s32.totalorder %s14, 1
      %s274 = scalar_select %p273, %s14, 1
      %s275 = smul.addr %s274, 2
      %s276 = smul.addr %s275, 8
      %s277 = scalar_lea.vmem %s3, %s276
      // Predicated region
      $region33: #{patchgan_discriminator.5} parent=31 // pred_check
        %p278 = pneg %p100
      $region34: #{patchgan_discriminator.5} parent=31 // pred_check_branch
        %280 = sbr.rel (%p278) target = $region36
      $region35: #{patchgan_discriminator.5} parent=31 // pred_region
        _
      $region36: #{patchgan_discriminator.5} parent=31 // pred_fallthru
        _
    $region32: #{patchgan_discriminator.5} parent=5 // pred_fallthru
      _
    %p281 = scmp.le.s32.totalorder 2, %s9
    // Predicated region
    $region37: #{patchgan_discriminator.5} parent=5 // pred_check
      %p282 = pneg %p281
    $region38: #{patchgan_discriminator.5} parent=5 // pred_check_branch
      %284 = sbr.rel (%p282) target = $region40
    $region39: #{patchgan_discriminator.5} parent=5 // pred_region
      %s285 = ssub.s32 %s9, 2
      // Predicated region
      $region41: #{patchgan_discriminator.5} parent=39 // pred_check
        %p286 = pneg %p106
      $region42: #{patchgan_discriminator.5} parent=39 // pred_check_branch
        %288 = sbr.rel (%p286) target = $region44
      $region43: #{patchgan_discriminator.5} parent=39 // pred_region
        %p289 = scmp.lt.s32.totalorder %s15, 1
        %s290 = scalar_select %p289, %s15, 1
        %s291 = smul.addr %s290, 2
        %s292 = smul.addr %s291, 8
        %s293 = scalar_lea.vmem %s3, %s292
      $region44: #{patchgan_discriminator.5} parent=39 // pred_fallthru
        _
    $region40: #{patchgan_discriminator.5} parent=5 // pred_fallthru
      _
  $region6: #{patchgan_discriminator.5} parent=0 // loop_footer
    %s13 = sadd.s32 1, %s9
  $region7: #{patchgan_discriminator.5} parent=0 // loop_footer_branch
    %8 = sbr.rel target = $region3
  $region8: #{patchgan_discriminator.5} parent=0 // loop_exit
    _

// kernel: patchgan_discriminator.6
$region0: #{patchgan_discriminator.6}
  #allocation0 [shape = 'u32[]', space=smem, size = 0x4, offset = 0x4, fixed_abs, tag = 'smem constant byte address 0x4 - core index']
  #allocation1 [shape = 'u32[144,128]{1,0:T(1,128)}', space=vmem, size = 0x12000, scoped, tag = 'internal scratch']
  %s0 = inlined_call_operand.vmem [shape: f32[2,128,64], index: 0, kind: input, shape index: {}]
  %s1 = inlined_call_operand.vmem [shape: f32[16,128], index: 1, kind: input, shape index: {}]
  %s2 = inlined_call_operand.vmem [shape: f32[16,1], index: 2, kind: input, shape index: {}]
  %s3 = inlined_call_operand.vmem [shape: f32[2,16,64], index: 3, kind: output, shape index: {}]
  %s4 = sld [smem:[#allocation0]]
  $region45: #{patchgan_discriminator.6} parent=0
    _
  %s6 = ssub.s32 1, %s4
  %s7 = scalar_select 0, %s6, %s4
  loop: start=0, step=1, limit=4
  $region2: #{patchgan_discriminator.6} parent=0 // loop_pre_header
    _
  $region3: #{patchgan_discriminator.6} parent=0 // loop_header
    %s9 = sphi 0, %s13
    %p10 = scmp.ge.s32.totalorder %s9, 4
    %s19 = sphi 0, %s21
    %s22 = sphi 0, %s19
    %s23 = sphi 0, %s22
    %s39 = sphi 0, %s23
    %s43 = sphi 0, %s43
    %s45 = sphi 0, %s43
    %s46 = sphi 0, %s45
    %s60 = sphi 0, %s46
    %s64 = sphi 0, %s64
    %s66 = sphi 0, %s64
    %s67 = sphi 0, %s66
    %s81 = sphi 0, %s67
    %s87 = sphi 0, %s89
    %s90 = sphi 0, %s87
    %s91 = sphi 0, %s90
    %s107 = sphi 0, %s91
  $region4: #{patchgan_discriminator.6} parent=0 // loop_header_branch
    %12 = sbr.rel (%p10) target = $region8
  $region5: #{patchgan_discriminator.6} parent=0 // loop_body
    %s14 = ssub.s32 %s9, 1
    %s15 = ssub.s32 %s9, 2
    %s16 = sadd.s32 %s9, 1
    %s17 = ssub.s32 %s9, %s16
    %p18 = scmp.eq.s32.totalorder %s17, 0
    %s20 = sadd.s32 %s19, 1
    %s21 = scalar_select %p18, %s19, %s20
    %p24 = pneg %p18
    %p25 = scmp.eq.s32.totalorder %s9, 1
    %p26 = por %p24, %p25
    %p27 = scmp.ne.s32.totalorder %s19, %s22
    %p28 = scmp.eq.s32.totalorder %s9, 0
    %p29 = por %p27, %p28
    %p30 = scmp.ne.s32.totalorder %s19, %s22
    %p31 = scmp.eq.s32.totalorder %s14, 1
    %p32 = por %p30, %p31
    %p33 = scmp.ne.s32.totalorder %s22, %s23
    %p34 = scmp.eq.s32.totalorder %s14, 0
    %p35 = por %p33, %p34
    %p36 = scmp.ne.s32.totalorder %s22, %s23
    %p37 = scmp.eq.s32.totalorder %s15, 1
    %p38 = por %p36, %p37
    %p40 = scmp.ne.s32.totalorder %s23, %s39
    %p41 = scmp.eq.s32.totalorder %s15, 0
    %p42 = por %p40, %p41
    %s44 = sadd.s32 %s43, 1
    %p47 = scmp.eq.s32.totalorder %s9, 1
    %p48 = scmp.ne.s32.totalorder %s43, %s45
    %p49 = scmp.eq.s32.totalorder %s9, 0
    %p50 = por %p48, %p49
    %p51 = scmp.ne.s32.totalorder %s43, %s45
    %p52 = scmp.eq.s32.totalorder %s14, 1
    %p53 = por %p51, %p52
    %p54 = scmp.ne.s32.totalorder %s45, %s46
    %p55 = scmp.eq.s32.totalorder %s14, 0
    %p56 = por %p54, %p55
    %p57 = scmp.ne.s32.totalorder %s45, %s46
    %p58 = scmp.eq.s32.totalorder %s15, 1
    %p59 = por %p57, %p58
    %p61 = scmp.ne.s32.totalorder %s46, %s60
    %p62 = scmp.eq.s32.totalorder %s15, 0
    %p63 = por %p61, %p62
    %s65 = sadd.s32 %s64, 1
    %p68 = scmp.eq.s32.totalorder %s9, 1
    %p69 = scmp.ne.s32.totalorder %s64, %s66
    %p70 = scmp.eq.s32.totalorder %s9, 0
    %p71 = por %p69, %p70
    %p72 = scmp.ne.s32.totalorder %s64, %s66
    %p73 = scmp.eq.s32.totalorder %s14, 1
    %p74 = por %p72, %p73
    %p75 = scmp.ne.s32.totalorder %s66, %s67
    %p76 = scmp.eq.s32.totalorder %s14, 0
    %p77 = por %p75, %p76
    %p78 = scmp.ne.s32.totalorder %s66, %s67
    %p79 = scmp.eq.s32.totalorder %s15, 1
    %p80 = por %p78, %p79
    %p82 = scmp.ne.s32.totalorder %s67, %s81
    %p83 = scmp.eq.s32.totalorder %s15, 0
    %p84 = por %p82, %p83
    %s85 = ssub.s32 %s9, %s16
    %p86 = scmp.eq.s32.totalorder %s85, 0
    %s88 = sadd.s32 %s87, 1
    %s89 = scalar_select %p86, %s87, %s88
    %p92 = pneg %p86
    %p93 = scmp.eq.s32.totalorder %s9, 1
    %p94 = por %p92, %p93
    %p95 = scmp.ne.s32.totalorder %s87, %s90
    %p96 = scmp.eq.s32.totalorder %s9, 0
    %p97 = por %p95, %p96
    %p98 = scmp.ne.s32.totalorder %s87, %s90
    %p99 = scmp.eq.s32.totalorder %s14, 1
    %p100 = por %p98, %p99
    %p101 = scmp.ne.s32.totalorder %s90, %s91
    %p102 = scmp.eq.s32.totalorder %s14, 0
    %p103 = por %p101, %p102
    %p104 = scmp.ne.s32.totalorder %s90, %s91
    %p105 = scmp.eq.s32.totalorder %s15, 1
    %p106 = por %p104, %p105
    %p108 = scmp.ne.s32.totalorder %s91, %s107
    %p109 = scmp.eq.s32.totalorder %s15, 0
    %p110 = por %p108, %p109
    %p111 = scmp.le.s32.totalorder 1, %s9
    %p112 = scmp.lt.s32.totalorder %s9, 3
    %p113 = pnand %p111, %p112
    %p114 = pneg %p113
    // Predicated region
    $region9: #{patchgan_discriminator.6} parent=5 // pred_check
      _
    $region10: #{patchgan_discriminator.6} parent=5 // pred_check_branch
      %116 = sbr.rel (%p113) target = $region12
    $region11: #{patchgan_discriminator.6} parent=5 // pred_region
      %s117 = ssub.s32 %s9, 1
      // Predicated region
      $region13: #{patchgan_discriminator.6} parent=11 // pred_check
        %p118 = pneg %p56
      $region14: #{patchgan_discriminator.6} parent=11 // pred_check_branch
        %120 = sbr.rel (%p118) target = $region16
      $region15: #{patchgan_discriminator.6} parent=11 // pred_region
        _
      $region16: #{patchgan_discriminator.6} parent=11 // pred_fallthru
        _
      // Predicated region
      $region17: #{patchgan_discriminator.6} parent=11 // pred_check
        %p121 = pneg %p77
      $region18: #{patchgan_discriminator.6} parent=11 // pred_check_branch
        %123 = sbr.rel (%p121) target = $region20
      $region19: #{patchgan_discriminator.6} parent=11 // pred_region
        _
      $region20: #{patchgan_discriminator.6} parent=11 // pred_fallthru
        _
    $region12: #{patchgan_discriminator.6} parent=5 // pred_fallthru
      _
    %p124 = scmp.lt.s32.totalorder %s9, 2
    // Predicated region
    $region21: #{patchgan_discriminator.6} parent=5 // pred_check
      %p125 = pneg %p124
    $region22: #{patchgan_discriminator.6} parent=5 // pred_check_branch
      %127 = sbr.rel (%p125) target = $region24
    $region23: #{patchgan_discriminator.6} parent=5 // pred_region
      // Predicated region
      $region25: #{patchgan_discriminator.6} parent=23 // pred_check
        %p128 = pneg %p29
      $region26: #{patchgan_discriminator.6} parent=23 // pred_check_branch
        %130 = sbr.rel (%p128) target = $region28
      $region27: #{patchgan_discriminator.6} parent=23 // pred_region
        %p131 = scmp.lt.s32.totalorder %s9, 1
        %s132 = scalar_select %p131, %s9, 1
        %s133 = smul.addr %s132, 16
        %s134 = smul.addr %s133, 8
        %s135 = scalar_lea.vmem %s0, %s134
      $region28: #{patchgan_discriminator.6} parent=23 // pred_fallthru
        _
    $region24: #{patchgan_discriminator.6} parent=5 // pred_fallthru
      _
    %p136 = scmp.le.s32.totalorder 1, %s9
    %p137 = scmp.lt.s32.totalorder %s9, 3
    %p138 = pnand %p136, %p137
    %p139 = pneg %p138
    // Predicated region
    $region29: #{patchgan_discriminator.6} parent=5 // pred_check
      _
    $region30: #{patchgan_discriminator.6} parent=5 // pred_check_branch
      %141 = sbr.rel (%p138) target = $region32
    $region31: #{patchgan_discriminator.6} parent=5 // pred_region
      %s142 = ssub.s32 %s9, 1
      %p143 = scmp.lt.s32.totalorder %s14, 1
      %s144 = scalar_select %p143, %s14, 1
      %s145 = smul.addr %s144, 16
      %s146 = smul.addr %s145, 8
      %s147 = scalar_lea.vmem %s0, %s146
      %p148 = pneg %p35
      %p149 = pneg %p32
      %p150 = pneg %p56
      %p151 = pneg %p53
      %p152 = pneg %p77
      %p153 = pneg %p74
      %p154 = pneg %p103
      %p155 = pneg %p100
      %p156 = scmp.lt.s32.totalorder %s14, 1
      %s157 = scalar_select %p156, %s14, 1
      %s158 = smul.addr %s157, 2
      %s159 = smul.addr %s158, 8
      %s160 = scalar_lea.vmem %s3, %s159
      %p161 = scmp.lt.s32.totalorder %s14, 1
      %s162 = scalar_select %p161, %s14, 1
      %s163 = smul.addr %s162, 16
      %s164 = smul.addr %s163, 8
      %s165 = scalar_lea.vmem %s0, %s164
      %p166 = scmp.lt.s32.totalorder %s14, 1
      %s167 = scalar_select %p166, %s14, 1
      %s168 = smul.addr %s167, 2
      %s169 = smul.addr %s168, 8
      %s170 = scalar_lea.vmem %s3, %s169
      %v171 = vld [vmem:[%s165] sm:$0xff]
      %v172 = vld [vmem:[%s165 + $0x8] sm:$0xff]
      %v173 = vld [vmem:[%s165 + $0x10] sm:$0xff]
      %v174 = vld [vmem:[%s165 + $0x18] sm:$0xff]
      %v175 = vld [vmem:[%s165 + $0x20] sm:$0xff]
      %v176 = vld [vmem:[%s165 + $0x28] sm:$0xff]
      %v177 = vld [vmem:[%s165 + $0x30] sm:$0xff]
      %v178 = vld [vmem:[%s165 + $0x38] sm:$0xff]
      %v179 = vld [vmem:[%s165 + $0x40] sm:$0xff]
      %v180 = vld [vmem:[%s165 + $0x48] sm:$0xff]
      %v181 = vld [vmem:[%s165 + $0x50] sm:$0xff]
      %v182 = vld [vmem:[%s165 + $0x58] sm:$0xff]
      %v183 = vld [vmem:[%s165 + $0x60] sm:$0xff]
      %v184 = vld [vmem:[%s165 + $0x68] sm:$0xff]
      %v185 = vld [vmem:[%s165 + $0x70] sm:$0xff]
      %v186 = vld [vmem:[%s165 + $0x78] sm:$0xff]
      %v187 = vld [vmem:[%s1] sm:$0xff]
      %v188 = vld [vmem:[%s1 + $0x8] sm:$0xff]
      %v189 = vld [vmem:[%s2] sm:$0xff]
      %v190 = vld [vmem:[%s2 + $0x8] sm:$0xff]
      %192 = vset.pattern.permute.xlu0 0
      %193 = vperm.xlu0 %192, %v189
      %v194 = vpop.permute.xlu0 %193
      %197 = vset.pattern.permute.xlu0 0
      %198 = vperm.xlu0 %197, %v190
      %v199 = vpop.permute.xlu0 %198
      %201 = vmatprep.subr.mxu0 0.0
      %202 = vmatpush1.msra.mxu0 %v171
      %203 = vmatprep.subr.mxu0 0.0
      %204 = vmatpush1.msra.mxu0 %v172
      %205 = vmatprep.subr.mxu0 0.0
      %206 = vmatpush1.msra.mxu0 %v173
      %207 = vmatprep.subr.mxu0 0.0
      %208 = vmatpush1.msra.mxu0 %v174
      %209 = vmatprep.subr.mxu0 0.0
      %210 = vmatpush1.msra.mxu0 %v175
      %211 = vmatprep.subr.mxu0 0.0
      %212 = vmatpush1.msra.mxu0 %v176
      %213 = vmatprep.subr.mxu0 0.0
      %214 = vmatpush1.msra.mxu0 %v177
      %215 = vmatprep.subr.mxu0 0.0
      %216 = vmatpush1.msra.mxu0 %v178
      %217 = vmatprep.subr.mxu0 0.0
      %218 = vmatpush1.msra.mxu0 %v179
      %219 = vmatprep.subr.mxu0 0.0
      %220 = vmatpush1.msra.mxu0 %v180
      %221 = vmatprep.subr.mxu0 0.0
      %222 = vmatpush1.msra.mxu0 %v181
      %223 = vmatprep.subr.mxu0 0.0
      %224 = vmatpush1.msra.mxu0 %v182
      %225 = vmatprep.subr.mxu0 0.0
      %226 = vmatpush1.msra.mxu0 %v183
      %227 = vmatprep.subr.mxu0 0.0
      %228 = vmatpush1.msra.mxu0 %v184
      %229 = vmatprep.subr.mxu0 0.0
      %230 = vmatpush1.msra.mxu0 %v185
      %231 = vmatprep.subr.mxu0 0.0
      %232 = vmatpush1.msra.mxu0 %v186
      %233 = vmatprep.subr.mxu0 0.0
      %234 = vmatpush1.msra.mxu0 0.0
      %235 = vmatprep.subr.mxu0 0.0
      %236 = vmatpush1.msra.mxu0 0.0
      %237 = vmatprep.subr.mxu0 0.0
      %238 = vmatpush1.msra.mxu0 0.0
      %239 = vmatprep.subr.mxu0 0.0
      %240 = vmatpush1.msra.mxu0 0.0
      %241 = vmatprep.subr.mxu0 0.0
      %242 = vmatpush1.msra.mxu0 0.0
      %243 = vmatprep.subr.mxu0 0.0
      %244 = vmatpush1.msra.mxu0 0.0
      %245 = vmatprep.subr.mxu0 0.0
      %246 = vmatpush1.msra.mxu0 0.0
      %247 = vmatprep.subr.mxu0 0.0
      %248 = vmatpush1.msra.mxu0 0.0
      %249 = vmatprep.subr.mxu0 0.0
      %250 = vmatpush1.msra.mxu0 0.0
      %251 = vmatprep.subr.mxu0 0.0
      %252 = vmatpush1.msra.mxu0 0.0
      %253 = vmatprep.subr.mxu0 0.0
      %254 = vmatpush1.msra.mxu0 0.0
      %255 = vmatprep.subr.mxu0 0.0
      %256 = vmatpush1.msra.mxu0 0.0
      %257 = vmatprep.subr.mxu0 0.0
      %258 = vmatpush1.msra.mxu0 0.0
      %259 = vmatprep.subr.mxu0 0.0
      %260 = vmatpush1.msra.mxu0 0.0
      %261 = vmatprep.subr.mxu0 0.0
      %262 = vmatpush1.msra.mxu0 0.0
      %263 = vmatprep.subr.mxu0 0.0
      %264 = vmatpush1.msra.mxu0 0.0
      %265 = vmatprep.mubr.f32.mxu0 0.0
      %266 = vmatmul.mubr.f32.gmra.mrb[0].mxu0 %v187
      %v267 = vpop.f32.mrb[0].mxu0
      %v268 = vadd.f32 %v194, %v267
      %v269 = vpop.f32.mrb[0].mxu0
      %270 = vmatprep.mubr.f32.mxu0 0.0
      %271 = vmatmul.mubr.f32.gmra.mrb[0].mxu0 %v188
      %v272 = vpop.f32.mrb[0].mxu0
      %v273 = vadd.f32 %v199, %v272
      %v274 = vpop.f32.mrb[0].mxu0
      %275 = vdwg.mxu0
      %vm276 = vcmask 523264
      %v277 = vsel %vm276, %v268, 0.0
      %278 = vadd.xlane.f32.xlu0 %v277
      %v279 = vpop.xlane.xlu0 %278
      %v280 = vsel %vm276, %v273, 0.0
      %281 = vadd.xlane.f32.xlu0 %v280
      %v282 = vpop.xlane.xlu0 %281
      %v283 = vrcp.pop 64.0
      %v284 = vmul.f32 %v279, %v283
      %v285 = vmul.f32 %v282, %v283
      %v286 = vsub.f32 %v268, %v284
      %v287 = vsub.f32 %v273, %v285
      %v288 = vmul.f32 %v286, %v286
      %v289 = vmul.f32 %v287, %v287
      %v290 = vsel %vm276, %v288, 0.0
      %291 = vadd.xlane.f32.xlu0 %v290
      %v292 = vpop.xlane.xlu0 %291
      %v293 = vsel %vm276, %v289, 0.0
      %294 = vadd.xlane.f32.xlu0 %v293
      %v295 = vpop.xlane.xlu0 %294
      %v296 = vmul.f32 %v292, %v283
      %v297 = vmul.f32 %v295, %v283
      %v298 = vadd.f32 %v296, 1e-05
      %v299 = vadd.f32 %v297, 1e-05
      %v300 = vrsqrt.pop %v298
      %v301 = vrsqrt.pop %v299
      %v302 = vmul.f32 %v286, %v300
      %v303 = vmul.f32 %v287, %v301
      %vm304 = vcmp.ge.f32.partialorder %v302, 0.0
      %vm305 = vcmp.ge.f32.partialorder %v303, 0.0
      %v306 = vmul.f32 %v302, 0.2
      %v307 = vmul.f32 %v303, 0.2
      %v308 = vsel %vm304, %v302, %v306
      %v309 = vsel %vm305, %v303, %v307
      %310 = vst.msk [vmem:[%s170] sm:$0xff] %vm276, %v308
      %311 = vst.msk [vmem:[%s170 + $0x8] sm:$0xff] %vm276, %v309
      %p312 = scmp.lt.s32.totalorder %s14, 1
      %s313 = scalar_select %p312, %s14, 1
      %s314 = smul.addr %s313, 2
      %s315 = smul.addr %s314, 8
      %s316 = scalar_lea.vmem %s3, %s315
      // Predicated region
      $region33: #{patchgan_discriminator.6} parent=31 // pred_check
        %p317 = pneg %p100
      $region34: #{patchgan_discriminator.6} parent=31 // pred_check_branch
        %319 = sbr.rel (%p317) target = $region36
      $region35: #{patchgan_discriminator.6} parent=31 // pred_region
        _
      $region36: #{patchgan_discriminator.6} parent=31 // pred_fallthru
        _
    $region32: #{patchgan_discriminator.6} parent=5 // pred_fallthru
      _
    %p320 = scmp.le.s32.totalorder 2, %s9
    // Predicated region
    $region37: #{patchgan_discriminator.6} parent=5 // pred_check
      %p321 = pneg %p320
    $region38: #{patchgan_discriminator.6} parent=5 // pred_check_branch
      %323 = sbr.rel (%p321) target = $region40
    $region39: #{patchgan_discriminator.6} parent=5 // pred_region
      %s324 = ssub.s32 %s9, 2
      // Predicated region
      $region41: #{patchgan_discriminator.6} parent=39 // pred_check
        %p325 = pneg %p106
      $region42: #{patchgan_discriminator.6} parent=39 // pred_check_branch
        %327 = sbr.rel (%p325) target = $region44
      $region43: #{patchgan_discriminator.6} parent=39 // pred_region
        %p328 = scmp.lt.s32.totalorder %s15, 1
        %s329 = scalar_select %p328, %s15, 1
        %s330 = smul.addr %s329, 2
        %s331 = smul.addr %s330, 8
        %s332 = scalar_lea.vmem %s3, %s331
      $region44: #{patchgan_discriminator.6} parent=39 // pred_fallthru
        _
    $region40: #{patchgan_discriminator.6} parent=5 // pred_fallthru
      _
  $region6: #{patchgan_discriminator.6} parent=0 // loop_footer
    %s13 = sadd.s32 1, %s9
  $region7: #{patchgan_discriminator.6} parent=0 // loop_footer_branch
    %8 = sbr.rel target = $region3
  $region8: #{patchgan_discriminator.6} parent=0 // loop_exit
    _

// kernel: patchgan_discriminator.7
$region0: #{patchgan_discriminator.7}
  #allocation0 [shape = 'u32[]', space=smem, size = 0x4, offset = 0x4, fixed_abs, tag = 'smem constant byte address 0x4 - core index']
  #allocation1 [shape = 'u32[144,128]{1,0:T(1,128)}', space=vmem, size = 0x12000, scoped, tag = 'internal scratch']
  %s0 = inlined_call_operand.vmem [shape: f32[2,256,16], index: 0, kind: input, shape index: {}]
  %s1 = inlined_call_operand.vmem [shape: f32[32,256], index: 1, kind: input, shape index: {}]
  %s2 = inlined_call_operand.vmem [shape: f32[32,1], index: 2, kind: input, shape index: {}]
  %s3 = inlined_call_operand.vmem [shape: f32[2,32,16], index: 3, kind: output, shape index: {}]
  %s4 = sld [smem:[#allocation0]]
  $region45: #{patchgan_discriminator.7} parent=0
    _
  %s6 = ssub.s32 1, %s4
  %s7 = scalar_select 0, %s6, %s4
  loop: start=0, step=1, limit=4
  $region2: #{patchgan_discriminator.7} parent=0 // loop_pre_header
    _
  $region3: #{patchgan_discriminator.7} parent=0 // loop_header
    %s9 = sphi 0, %s13
    %p10 = scmp.ge.s32.totalorder %s9, 4
    %s19 = sphi 0, %s21
    %s22 = sphi 0, %s19
    %s23 = sphi 0, %s22
    %s39 = sphi 0, %s23
    %s43 = sphi 0, %s43
    %s45 = sphi 0, %s43
    %s46 = sphi 0, %s45
    %s60 = sphi 0, %s46
    %s64 = sphi 0, %s64
    %s66 = sphi 0, %s64
    %s67 = sphi 0, %s66
    %s81 = sphi 0, %s67
    %s87 = sphi 0, %s89
    %s90 = sphi 0, %s87
    %s91 = sphi 0, %s90
    %s107 = sphi 0, %s91
  $region4: #{patchgan_discriminator.7} parent=0 // loop_header_branch
    %12 = sbr.rel (%p10) target = $region8
  $region5: #{patchgan_discriminator.7} parent=0 // loop_body
    %s14 = ssub.s32 %s9, 1
    %s15 = ssub.s32 %s9, 2
    %s16 = sadd.s32 %s9, 1
    %s17 = ssub.s32 %s9, %s16
    %p18 = scmp.eq.s32.totalorder %s17, 0
    %s20 = sadd.s32 %s19, 1
    %s21 = scalar_select %p18, %s19, %s20
    %p24 = pneg %p18
    %p25 = scmp.eq.s32.totalorder %s9, 1
    %p26 = por %p24, %p25
    %p27 = scmp.ne.s32.totalorder %s19, %s22
    %p28 = scmp.eq.s32.totalorder %s9, 0
    %p29 = por %p27, %p28
    %p30 = scmp.ne.s32.totalorder %s19, %s22
    %p31 = scmp.eq.s32.totalorder %s14, 1
    %p32 = por %p30, %p31
    %p33 = scmp.ne.s32.totalorder %s22, %s23
    %p34 = scmp.eq.s32.totalorder %s14, 0
    %p35 = por %p33, %p34
    %p36 = scmp.ne.s32.totalorder %s22, %s23
    %p37 = scmp.eq.s32.totalorder %s15, 1
    %p38 = por %p36, %p37
    %p40 = scmp.ne.s32.totalorder %s23, %s39
    %p41 = scmp.eq.s32.totalorder %s15, 0
    %p42 = por %p40, %p41
    %s44 = sadd.s32 %s43, 1
    %p47 = scmp.eq.s32.totalorder %s9, 1
    %p48 = scmp.ne.s32.totalorder %s43, %s45
    %p49 = scmp.eq.s32.totalorder %s9, 0
    %p50 = por %p48, %p49
    %p51 = scmp.ne.s32.totalorder %s43, %s45
    %p52 = scmp.eq.s32.totalorder %s14, 1
    %p53 = por %p51, %p52
    %p54 = scmp.ne.s32.totalorder %s45, %s46
    %p55 = scmp.eq.s32.totalorder %s14, 0
    %p56 = por %p54, %p55
    %p57 = scmp.ne.s32.totalorder %s45, %s46
    %p58 = scmp.eq.s32.totalorder %s15, 1
    %p59 = por %p57, %p58
    %p61 = scmp.ne.s32.totalorder %s46, %s60
    %p62 = scmp.eq.s32.totalorder %s15, 0
    %p63 = por %p61, %p62
    %s65 = sadd.s32 %s64, 1
    %p68 = scmp.eq.s32.totalorder %s9, 1
    %p69 = scmp.ne.s32.totalorder %s64, %s66
    %p70 = scmp.eq.s32.totalorder %s9, 0
    %p71 = por %p69, %p70
    %p72 = scmp.ne.s32.totalorder %s64, %s66
    %p73 = scmp.eq.s32.totalorder %s14, 1
    %p74 = por %p72, %p73
    %p75 = scmp.ne.s32.totalorder %s66, %s67
    %p76 = scmp.eq.s32.totalorder %s14, 0
    %p77 = por %p75, %p76
    %p78 = scmp.ne.s32.totalorder %s66, %s67
    %p79 = scmp.eq.s32.totalorder %s15, 1
    %p80 = por %p78, %p79
    %p82 = scmp.ne.s32.totalorder %s67, %s81
    %p83 = scmp.eq.s32.totalorder %s15, 0
    %p84 = por %p82, %p83
    %s85 = ssub.s32 %s9, %s16
    %p86 = scmp.eq.s32.totalorder %s85, 0
    %s88 = sadd.s32 %s87, 1
    %s89 = scalar_select %p86, %s87, %s88
    %p92 = pneg %p86
    %p93 = scmp.eq.s32.totalorder %s9, 1
    %p94 = por %p92, %p93
    %p95 = scmp.ne.s32.totalorder %s87, %s90
    %p96 = scmp.eq.s32.totalorder %s9, 0
    %p97 = por %p95, %p96
    %p98 = scmp.ne.s32.totalorder %s87, %s90
    %p99 = scmp.eq.s32.totalorder %s14, 1
    %p100 = por %p98, %p99
    %p101 = scmp.ne.s32.totalorder %s90, %s91
    %p102 = scmp.eq.s32.totalorder %s14, 0
    %p103 = por %p101, %p102
    %p104 = scmp.ne.s32.totalorder %s90, %s91
    %p105 = scmp.eq.s32.totalorder %s15, 1
    %p106 = por %p104, %p105
    %p108 = scmp.ne.s32.totalorder %s91, %s107
    %p109 = scmp.eq.s32.totalorder %s15, 0
    %p110 = por %p108, %p109
    %p111 = scmp.le.s32.totalorder 1, %s9
    %p112 = scmp.lt.s32.totalorder %s9, 3
    %p113 = pnand %p111, %p112
    %p114 = pneg %p113
    // Predicated region
    $region9: #{patchgan_discriminator.7} parent=5 // pred_check
      _
    $region10: #{patchgan_discriminator.7} parent=5 // pred_check_branch
      %116 = sbr.rel (%p113) target = $region12
    $region11: #{patchgan_discriminator.7} parent=5 // pred_region
      %s117 = ssub.s32 %s9, 1
      // Predicated region
      $region13: #{patchgan_discriminator.7} parent=11 // pred_check
        %p118 = pneg %p56
      $region14: #{patchgan_discriminator.7} parent=11 // pred_check_branch
        %120 = sbr.rel (%p118) target = $region16
      $region15: #{patchgan_discriminator.7} parent=11 // pred_region
        _
      $region16: #{patchgan_discriminator.7} parent=11 // pred_fallthru
        _
      // Predicated region
      $region17: #{patchgan_discriminator.7} parent=11 // pred_check
        %p121 = pneg %p77
      $region18: #{patchgan_discriminator.7} parent=11 // pred_check_branch
        %123 = sbr.rel (%p121) target = $region20
      $region19: #{patchgan_discriminator.7} parent=11 // pred_region
        _
      $region20: #{patchgan_discriminator.7} parent=11 // pred_fallthru
        _
    $region12: #{patchgan_discriminator.7} parent=5 // pred_fallthru
      _
    %p124 = scmp.lt.s32.totalorder %s9, 2
    // Predicated region
    $region21: #{patchgan_discriminator.7} parent=5 // pred_check
      %p125 = pneg %p124
    $region22: #{patchgan_discriminator.7} parent=5 // pred_check_branch
      %127 = sbr.rel (%p125) target = $region24
    $region23: #{patchgan_discriminator.7} parent=5 // pred_region
      // Predicated region
      $region25: #{patchgan_discriminator.7} parent=23 // pred_check
        %p128 = pneg %p29
      $region26: #{patchgan_discriminator.7} parent=23 // pred_check_branch
        %130 = sbr.rel (%p128) target = $region28
      $region27: #{patchgan_discriminator.7} parent=23 // pred_region
        %p131 = scmp.lt.s32.totalorder %s9, 1
        %s132 = scalar_select %p131, %s9, 1
        %s133 = smul.addr %s132, 32
        %s134 = smul.addr %s133, 8
        %s135 = scalar_lea.vmem %s0, %s134
      $region28: #{patchgan_discriminator.7} parent=23 // pred_fallthru
        _
    $region24: #{patchgan_discriminator.7} parent=5 // pred_fallthru
      _
    %p136 = scmp.le.s32.totalorder 1, %s9
    %p137 = scmp.lt.s32.totalorder %s9, 3
    %p138 = pnand %p136, %p137
    %p139 = pneg %p138
    // Predicated region
    $region29: #{patchgan_discriminator.7} parent=5 // pred_check
      _
    $region30: #{patchgan_discriminator.7} parent=5 // pred_check_branch
      %141 = sbr.rel (%p138) target = $region32
    $region31: #{patchgan_discriminator.7} parent=5 // pred_region
      %s142 = ssub.s32 %s9, 1
      %p143 = scmp.lt.s32.totalorder %s14, 1
      %s144 = scalar_select %p143, %s14, 1
      %s145 = smul.addr %s144, 32
      %s146 = smul.addr %s145, 8
      %s147 = scalar_lea.vmem %s0, %s146
      %p148 = pneg %p35
      %p149 = pneg %p32
      %p150 = pneg %p56
      %p151 = pneg %p53
      %p152 = pneg %p77
      %p153 = pneg %p74
      %p154 = pneg %p103
      %p155 = pneg %p100
      %p156 = scmp.lt.s32.totalorder %s14, 1
      %s157 = scalar_select %p156, %s14, 1
      %s158 = smul.addr %s157, 4
      %s159 = smul.addr %s158, 8
      %s160 = scalar_lea.vmem %s3, %s159
      %p161 = scmp.lt.s32.totalorder %s14, 1
      %s162 = scalar_select %p161, %s14, 1
      %s163 = smul.addr %s162, 32
      %s164 = smul.addr %s163, 8
      %s165 = scalar_lea.vmem %s0, %s164
      %p166 = scmp.lt.s32.totalorder %s14, 1
      %s167 = scalar_select %p166, %s14, 1
      %s168 = smul.addr %s167, 4
      %s169 = smul.addr %s168, 8
      %s170 = scalar_lea.vmem %s3, %s169
      %v171 = vld [vmem:[%s165] sm:$0xff]
      %v172 = vld [vmem:[%s165 + $0x8] sm:$0xff]
      %v173 = vld [vmem:[%s165 + $0x10] sm:$0xff]
      %v174 = vld [vmem:[%s165 + $0x18] sm:$0xff]
      %v175 = vld [vmem:[%s165 + $0x20] sm:$0xff]
      %v176 = vld [vmem:[%s165 + $0x28] sm:$0xff]
      %v177 = vld [vmem:[%s165 + $0x30] sm:$0xff]
      %v178 = vld [vmem:[%s165 + $0x38] sm:$0xff]
      %v179 = vld [vmem:[%s165 + $0x40] sm:$0xff]
      %v180 = vld [vmem:[%s165 + $0x48] sm:$0xff]
      %v181 = vld [vmem:[%s165 + $0x50] sm:$0xff]
      %v182 = vld [vmem:[%s165 + $0x58] sm:$0xff]
      %v183 = vld [vmem:[%s165 + $0x60] sm:$0xff]
      %v184 = vld [vmem:[%s165 + $0x68] sm:$0xff]
      %v185 = vld [vmem:[%s165 + $0x70] sm:$0xff]
      %v186 = vld [vmem:[%s165 + $0x78] sm:$0xff]
      %v187 = vld [vmem:[%s165 + $0x80] sm:$0xff]
      %v188 = vld [vmem:[%s165 + $0x88] sm:$0xff]
      %v189 = vld [vmem:[%s165 + $0x90] sm:$0xff]
      %v190 = vld [vmem:[%s165 + $0x98] sm:$0xff]
      %v191 = vld [vmem:[%s165 + $0xa0] sm:$0xff]
      %v192 = vld [vmem:[%s165 + $0xa8] sm:$0xff]
      %v193 = vld [vmem:[%s165 + $0xb0] sm:$0xff]
      %v194 = vld [vmem:[%s165 + $0xb8] sm:$0xff]
      %v195 = vld [vmem:[%s165 + $0xc0] sm:$0xff]
      %v196 = vld [vmem:[%s165 + $0xc8] sm:$0xff]
      %v197 = vld [vmem:[%s165 + $0xd0] sm:$0xff]
      %v198 = vld [vmem:[%s165 + $0xd8] sm:$0xff]
      %v199 = vld [vmem:[%s165 + $0xe0] sm:$0xff]
      %v200 = vld [vmem:[%s165 + $0xe8] sm:$0xff]
      %v201 = vld [vmem:[%s165 + $0xf0] sm:$0xff]
      %v202 = vld [vmem:[%s165 + $0xf8] sm:$0xff]
      %v203 = vld [vmem:[%s1] sm:$0xff]
      %v204 = vld [vmem:[%s1 + $0x8] sm:$0xff]
      %v205 = vld [vmem:[%s1 + $0x10] sm:$0xff]
      %v206 = vld [vmem:[%s1 + $0x18] sm:$0xff]
      %v207 = vld [vmem:[%s1 + $0x20] sm:$0xff]
      %v208 = vld [vmem:[%s1 + $0x28] sm:$0xff]
      %v209 = vld [vmem:[%s1 + $0x30] sm:$0xff]
      %v210 = vld [vmem:[%s1 + $0x38] sm:$0xff]
      %v211 = vld [vmem:[%s2] sm:$0xff]
      %v212 = vld [vmem:[%s2 + $0x8] sm:$0xff]
      %v213 = vld [vmem:[%s2 + $0x10] sm:$0xff]
      %v214 = vld [vmem:[%s2 + $0x18] sm:$0xff]
      %216 = vset.pattern.permute.xlu0 0
      %217 = vperm.xlu0 %216, %v211
      %v218 = vpop.permute.xlu0 %217
      %221 = vset.pattern.permute.xlu0 0
      %222 = vperm.xlu0 %221, %v212
      %v223 = vpop.permute.xlu0 %222
      %226 = vset.pattern.permute.xlu0 0
      %227 = vperm.xlu0 %226, %v213
      %v228 = vpop.permute.xlu0 %227
      %231 = vset.pattern.permute.xlu0 0
      %232 = vperm.xlu0 %231, %v214
      %v233 = vpop.permute.xlu0 %232
      %235 = vmatprep.subr.mxu0 0.0
      %236 = vmatpush1.msra.mxu0 %v171
      %237 = vmatprep.subr.mxu0 0.0
      %238 = vmatpush1.msra.mxu0 %v172
      %239 = vmatprep.subr.mxu0 0.0
      %240 = vmatpush1.msra.mxu0 %v173
      %241 = vmatprep.subr.mxu0 0.0
      %242 = vmatpush1.msra.mxu0 %v174
      %243 = vmatprep.subr.mxu0 0.0
      %244 = vmatpush1.msra.mxu0 %v175
      %245 = vmatprep.subr.mxu0 0.0
      %246 = vmatpush1.msra.mxu0 %v176
      %247 = vmatprep.subr.mxu0 0.0
      %248 = vmatpush1.msra.mxu0 %v177
      %249 = vmatprep.subr.mxu0 0.0
      %250 = vmatpush1.msra.mxu0 %v178
      %251 = vmatprep.subr.mxu0 0.0
      %252 = vmatpush1.msra.mxu0 %v179
      %253 = vmatprep.subr.mxu0 0.0
      %254 = vmatpush1.msra.mxu0 %v180
      %255 = vmatprep.subr.mxu0 0.0
      %256 = vmatpush1.msra.mxu0 %v181
      %257 = vmatprep.subr.mxu0 0.0
      %258 = vmatpush1.msra.mxu0 %v182
      %259 = vmatprep.subr.mxu0 0.0
      %260 = vmatpush1.msra.mxu0 %v183
      %261 = vmatprep.subr.mxu0 0.0
      %262 = vmatpush1.msra.mxu0 %v184
      %263 = vmatprep.subr.mxu0 0.0
      %264 = vmatpush1.msra.mxu0 %v185
      %265 = vmatprep.subr.mxu0 0.0
      %266 = vmatpush1.msra.mxu0 %v186
      %267 = vmatprep.subr.mxu0 0.0
      %268 = vmatpush1.msra.mxu0 %v187
      %269 = vmatprep.subr.mxu0 0.0
      %270 = vmatpush1.msra.mxu0 %v188
      %271 = vmatprep.subr.mxu0 0.0
      %272 = vmatpush1.msra.mxu0 %v189
      %273 = vmatprep.subr.mxu0 0.0
      %274 = vmatpush1.msra.mxu0 %v190
      %275 = vmatprep.subr.mxu0 0.0
      %276 = vmatpush1.msra.mxu0 %v191
      %277 = vmatprep.subr.mxu0 0.0
      %278 = vmatpush1.msra.mxu0 %v192
      %279 = vmatprep.subr.mxu0 0.0
      %280 = vmatpush1.msra.mxu0 %v193
      %281 = vmatprep.subr.mxu0 0.0
      %282 = vmatpush1.msra.mxu0 %v194
      %283 = vmatprep.subr.mxu0 0.0
      %284 = vmatpush1.msra.mxu0 %v195
      %285 = vmatprep.subr.mxu0 0.0
      %286 = vmatpush1.msra.mxu0 %v196
      %287 = vmatprep.subr.mxu0 0.0
      %288 = vmatpush1.msra.mxu0 %v197
      %289 = vmatprep.subr.mxu0 0.0
      %290 = vmatpush1.msra.mxu0 %v198
      %291 = vmatprep.subr.mxu0 0.0
      %292 = vmatpush1.msra.mxu0 %v199
      %293 = vmatprep.subr.mxu0 0.0
      %294 = vmatpush1.msra.mxu0 %v200
      %295 = vmatprep.subr.mxu0 0.0
      %296 = vmatpush1.msra.mxu0 %v201
      %297 = vmatprep.subr.mxu0 0.0
      %298 = vmatpush1.msra.mxu0 %v202
      %299 = vmatprep.mubr.f32.mxu0 %v204
      %300 = vmatmul.mubr.f32.gmra.mrb[0].mxu0 %v203
      %v301 = vpop.f32.mrb[0].mxu0
      %v302 = vadd.f32 %v218, %v301
      %v303 = vpop.f32.mrb[0].mxu0
      %304 = vmatprep.mubr.f32.mxu0 %v206
      %305 = vmatmul.mubr.f32.gmra.mrb[0].mxu0 %v205
      %v306 = vpop.f32.mrb[0].mxu0
      %v307 = vadd.f32 %v223, %v306
      %v308 = vpop.f32.mrb[0].mxu0
      %309 = vmatprep.mubr.f32.mxu0 %v208
      %310 = vmatmul.mubr.f32.gmra.mrb[0].mxu0 %v207
      %v311 = vpop.f32.mrb[0].mxu0
      %v312 = vadd.f32 %v228, %v311
      %v313 = vpop.f32.mrb[0].mxu0
      %314 = vmatprep.mubr.f32.mxu0 %v210
      %315 = vmatmul.mubr.f32.gmra.mrb[0].mxu0 %v209
      %v316 = vpop.f32.mrb[0].mxu0
      %v317 = vadd.f32 %v233, %v316
      %v318 = vpop.f32.mrb[0].mxu0
      %319 = vdwg.mxu0
      %vm320 = vcmask 130048
      %v321 = vsel %vm320, %v302, 0.0
      %322 = vadd.xlane.f32.xlu0 %v321
      %v323 = vpop.xlane.xlu0 %322
      %v324 = vsel %vm320, %v307, 0.0
      %325 = vadd.xlane.f32.xlu0 %v324
      %v326 = vpop.xlane.xlu0 %325
      %v327 = vsel %vm320, %v312, 0.0
      %328 = vadd.xlane.f32.xlu0 %v327
      %v329 = vpop.xlane.xlu0 %328
      %v330 = vsel %vm320, %v317, 0.0
      %331 = vadd.xlane.f32.xlu0 %v330
      %v332 = vpop.xlane.xlu0 %331
      %v333 = vrcp.pop 16.0
      %v334 = vmul.f32 %v323, %v333
      %v335 = vmul.f32 %v326, %v333
      %v336 = vmul.f32 %v329, %v333
      %v337 = vmul.f32 %v332, %v333
      %v338 = vsub.f32 %v302, %v334
      %v339 = vsub.f32 %v307, %v335
      %v340 = vsub.f32 %v312, %v336
      %v341 = vsub.f32 %v317, %v337
      %v342 = vmul.f32 %v338, %v338
      %v343 = vmul.f32 %v339, %v339
      %v344 = vmul.f32 %v340, %v340
      %v345 = vmul.f32 %v341, %v341
      %v346 = vsel %vm320, %v342, 0.0
      %347 = vadd.xlane.f32.xlu0 %v346
      %v348 = vpop.xlane.xlu0 %347
      %v349 = vsel %vm320, %v343, 0.0
      %350 = vadd.xlane.f32.xlu0 %v349
      %v351 = vpop.xlane.xlu0 %350
      %v352 = vsel %vm320, %v344, 0.0
      %353 = vadd.xlane.f32.xlu0 %v352
      %v354 = vpop.xlane.xlu0 %353
      %v355 = vsel %vm320, %v345, 0.0
      %356 = vadd.xlane.f32.xlu0 %v355
      %v357 = vpop.xlane.xlu0 %356
      %v358 = vmul.f32 %v348, %v333
      %v359 = vmul.f32 %v351, %v333
      %v360 = vmul.f32 %v354, %v333
      %v361 = vmul.f32 %v357, %v333
      %v362 = vadd.f32 %v358, 1e-05
      %v363 = vadd.f32 %v359, 1e-05
      %v364 = vadd.f32 %v360, 1e-05
      %v365 = vadd.f32 %v361, 1e-05
      %v366 = vrsqrt.pop %v362
      %v367 = vrsqrt.pop %v363
      %v368 = vrsqrt.pop %v364
      %v369 = vrsqrt.pop %v365
      %v370 = vmul.f32 %v338, %v366
      %v371 = vmul.f32 %v339, %v367
      %v372 = vmul.f32 %v340, %v368
      %v373 = vmul.f32 %v341, %v369
      %vm374 = vcmp.ge.f32.partialorder %v370, 0.0
      %vm375 = vcmp.ge.f32.partialorder %v371, 0.0
      %vm376 = vcmp.ge.f32.partialorder %v372, 0.0
      %vm377 = vcmp.ge.f32.partialorder %v373, 0.0
      %v378 = vmul.f32 %v370, 0.2
      %v379 = vmul.f32 %v371, 0.2
      %v380 = vmul.f32 %v372, 0.2
      %v381 = vmul.f32 %v373, 0.2
      %v382 = vsel %vm374, %v370, %v378
      %v383 = vsel %vm375, %v371, %v379
      %v384 = vsel %vm376, %v372, %v380
      %v385 = vsel %vm377, %v373, %v381
      %386 = vst.msk [vmem:[%s170] sm:$0xff] %vm320, %v382
      %387 = vst.msk [vmem:[%s170 + $0x8] sm:$0xff] %vm320, %v383
      %388 = vst.msk [vmem:[%s170 + $0x10] sm:$0xff] %vm320, %v384
      %389 = vst.msk [vmem:[%s170 + $0x18] sm:$0xff] %vm320, %v385
      %p390 = scmp.lt.s32.totalorder %s14, 1
      %s391 = scalar_select %p390, %s14, 1
      %s392 = smul.addr %s391, 4
      %s393 = smul.addr %s392, 8
      %s394 = scalar_lea.vmem %s3, %s393
      // Predicated region
      $region33: #{patchgan_discriminator.7} parent=31 // pred_check
        %p395 = pneg %p100
      $region34: #{patchgan_discriminator.7} parent=31 // pred_check_branch
        %397 = sbr.rel (%p395) target = $region36
      $region35: #{patchgan_discriminator.7} parent=31 // pred_region
        _
      $region36: #{patchgan_discriminator.7} parent=31 // pred_fallthru
        _
    $region32: #{patchgan_discriminator.7} parent=5 // pred_fallthru
      _
    %p398 = scmp.le.s32.totalorder 2, %s9
    // Predicated region
    $region37: #{patchgan_discriminator.7} parent=5 // pred_check
      %p399 = pneg %p398
    $region38: #{patchgan_discriminator.7} parent=5 // pred_check_branch
      %401 = sbr.rel (%p399) target = $region40
    $region39: #{patchgan_discriminator.7} parent=5 // pred_region
      %s402 = ssub.s32 %s9, 2
      // Predicated region
      $region41: #{patchgan_discriminator.7} parent=39 // pred_check
        %p403 = pneg %p106
      $region42: #{patchgan_discriminator.7} parent=39 // pred_check_branch
        %405 = sbr.rel (%p403) target = $region44
      $region43: #{patchgan_discriminator.7} parent=39 // pred_region
        %p406 = scmp.lt.s32.totalorder %s15, 1
        %s407 = scalar_select %p406, %s15, 1
        %s408 = smul.addr %s407, 4
        %s409 = smul.addr %s408, 8
        %s410 = scalar_lea.vmem %s3, %s409
      $region44: #{patchgan_discriminator.7} parent=39 // pred_fallthru
        _
    $region40: #{patchgan_discriminator.7} parent=5 // pred_fallthru
      _
  $region6: #{patchgan_discriminator.7} parent=0 // loop_footer
    %s13 = sadd.s32 1, %s9
  $region7: #{patchgan_discriminator.7} parent=0 // loop_footer_branch
    %8 = sbr.rel target = $region3
  $region8: #{patchgan_discriminator.7} parent=0 // loop_exit
    _

// kernel: patchgan_discriminator.8
$region0: #{patchgan_discriminator.8}
  #allocation0 [shape = 'u32[]', space=smem, size = 0x4, offset = 0x4, fixed_abs, tag = 'smem constant byte address 0x4 - core index']
  #allocation1 [shape = 'u32[144,128]{1,0:T(1,128)}', space=vmem, size = 0x12000, scoped, tag = 'internal scratch']
  %s0 = inlined_call_operand.vmem [shape: f32[2,512,9], index: 0, kind: input, shape index: {}]
  %s1 = inlined_call_operand.vmem [shape: f32[64,512], index: 1, kind: input, shape index: {}]
  %s2 = inlined_call_operand.vmem [shape: f32[64,1], index: 2, kind: input, shape index: {}]
  %s3 = inlined_call_operand.vmem [shape: f32[2,64,9], index: 3, kind: output, shape index: {}]
  %s4 = sld [smem:[#allocation0]]
  $region45: #{patchgan_discriminator.8} parent=0
    _
  %s6 = ssub.s32 1, %s4
  %s7 = scalar_select 0, %s6, %s4
  loop: start=0, step=1, limit=4
  $region2: #{patchgan_discriminator.8} parent=0 // loop_pre_header
    _
  $region3: #{patchgan_discriminator.8} parent=0 // loop_header
    %s9 = sphi 0, %s13
    %p10 = scmp.ge.s32.totalorder %s9, 4
    %s19 = sphi 0, %s21
    %s22 = sphi 0, %s19
    %s23 = sphi 0, %s22
    %s39 = sphi 0, %s23
    %s43 = sphi 0, %s43
    %s45 = sphi 0, %s43
    %s46 = sphi 0, %s45
    %s60 = sphi 0, %s46
    %s64 = sphi 0, %s64
    %s66 = sphi 0, %s64
    %s67 = sphi 0, %s66
    %s81 = sphi 0, %s67
    %s87 = sphi 0, %s89
    %s90 = sphi 0, %s87
    %s91 = sphi 0, %s90
    %s107 = sphi 0, %s91
  $region4: #{patchgan_discriminator.8} parent=0 // loop_header_branch
    %12 = sbr.rel (%p10) target = $region8
  $region5: #{patchgan_discriminator.8} parent=0 // loop_body
    %s14 = ssub.s32 %s9, 1
    %s15 = ssub.s32 %s9, 2
    %s16 = sadd.s32 %s9, 1
    %s17 = ssub.s32 %s9, %s16
    %p18 = scmp.eq.s32.totalorder %s17, 0
    %s20 = sadd.s32 %s19, 1
    %s21 = scalar_select %p18, %s19, %s20
    %p24 = pneg %p18
    %p25 = scmp.eq.s32.totalorder %s9, 1
    %p26 = por %p24, %p25
    %p27 = scmp.ne.s32.totalorder %s19, %s22
    %p28 = scmp.eq.s32.totalorder %s9, 0
    %p29 = por %p27, %p28
    %p30 = scmp.ne.s32.totalorder %s19, %s22
    %p31 = scmp.eq.s32.totalorder %s14, 1
    %p32 = por %p30, %p31
    %p33 = scmp.ne.s32.totalorder %s22, %s23
    %p34 = scmp.eq.s32.totalorder %s14, 0
    %p35 = por %p33, %p34
    %p36 = scmp.ne.s32.totalorder %s22, %s23
    %p37 = scmp.eq.s32.totalorder %s15, 1
    %p38 = por %p36, %p37
    %p40 = scmp.ne.s32.totalorder %s23, %s39
    %p41 = scmp.eq.s32.totalorder %s15, 0
    %p42 = por %p40, %p41
    %s44 = sadd.s32 %s43, 1
    %p47 = scmp.eq.s32.totalorder %s9, 1
    %p48 = scmp.ne.s32.totalorder %s43, %s45
    %p49 = scmp.eq.s32.totalorder %s9, 0
    %p50 = por %p48, %p49
    %p51 = scmp.ne.s32.totalorder %s43, %s45
    %p52 = scmp.eq.s32.totalorder %s14, 1
    %p53 = por %p51, %p52
    %p54 = scmp.ne.s32.totalorder %s45, %s46
    %p55 = scmp.eq.s32.totalorder %s14, 0
    %p56 = por %p54, %p55
    %p57 = scmp.ne.s32.totalorder %s45, %s46
    %p58 = scmp.eq.s32.totalorder %s15, 1
    %p59 = por %p57, %p58
    %p61 = scmp.ne.s32.totalorder %s46, %s60
    %p62 = scmp.eq.s32.totalorder %s15, 0
    %p63 = por %p61, %p62
    %s65 = sadd.s32 %s64, 1
    %p68 = scmp.eq.s32.totalorder %s9, 1
    %p69 = scmp.ne.s32.totalorder %s64, %s66
    %p70 = scmp.eq.s32.totalorder %s9, 0
    %p71 = por %p69, %p70
    %p72 = scmp.ne.s32.totalorder %s64, %s66
    %p73 = scmp.eq.s32.totalorder %s14, 1
    %p74 = por %p72, %p73
    %p75 = scmp.ne.s32.totalorder %s66, %s67
    %p76 = scmp.eq.s32.totalorder %s14, 0
    %p77 = por %p75, %p76
    %p78 = scmp.ne.s32.totalorder %s66, %s67
    %p79 = scmp.eq.s32.totalorder %s15, 1
    %p80 = por %p78, %p79
    %p82 = scmp.ne.s32.totalorder %s67, %s81
    %p83 = scmp.eq.s32.totalorder %s15, 0
    %p84 = por %p82, %p83
    %s85 = ssub.s32 %s9, %s16
    %p86 = scmp.eq.s32.totalorder %s85, 0
    %s88 = sadd.s32 %s87, 1
    %s89 = scalar_select %p86, %s87, %s88
    %p92 = pneg %p86
    %p93 = scmp.eq.s32.totalorder %s9, 1
    %p94 = por %p92, %p93
    %p95 = scmp.ne.s32.totalorder %s87, %s90
    %p96 = scmp.eq.s32.totalorder %s9, 0
    %p97 = por %p95, %p96
    %p98 = scmp.ne.s32.totalorder %s87, %s90
    %p99 = scmp.eq.s32.totalorder %s14, 1
    %p100 = por %p98, %p99
    %p101 = scmp.ne.s32.totalorder %s90, %s91
    %p102 = scmp.eq.s32.totalorder %s14, 0
    %p103 = por %p101, %p102
    %p104 = scmp.ne.s32.totalorder %s90, %s91
    %p105 = scmp.eq.s32.totalorder %s15, 1
    %p106 = por %p104, %p105
    %p108 = scmp.ne.s32.totalorder %s91, %s107
    %p109 = scmp.eq.s32.totalorder %s15, 0
    %p110 = por %p108, %p109
    %p111 = scmp.le.s32.totalorder 1, %s9
    %p112 = scmp.lt.s32.totalorder %s9, 3
    %p113 = pnand %p111, %p112
    %p114 = pneg %p113
    // Predicated region
    $region9: #{patchgan_discriminator.8} parent=5 // pred_check
      _
    $region10: #{patchgan_discriminator.8} parent=5 // pred_check_branch
      %116 = sbr.rel (%p113) target = $region12
    $region11: #{patchgan_discriminator.8} parent=5 // pred_region
      %s117 = ssub.s32 %s9, 1
      // Predicated region
      $region13: #{patchgan_discriminator.8} parent=11 // pred_check
        %p118 = pneg %p56
      $region14: #{patchgan_discriminator.8} parent=11 // pred_check_branch
        %120 = sbr.rel (%p118) target = $region16
      $region15: #{patchgan_discriminator.8} parent=11 // pred_region
        _
      $region16: #{patchgan_discriminator.8} parent=11 // pred_fallthru
        _
      // Predicated region
      $region17: #{patchgan_discriminator.8} parent=11 // pred_check
        %p121 = pneg %p77
      $region18: #{patchgan_discriminator.8} parent=11 // pred_check_branch
        %123 = sbr.rel (%p121) target = $region20
      $region19: #{patchgan_discriminator.8} parent=11 // pred_region
        _
      $region20: #{patchgan_discriminator.8} parent=11 // pred_fallthru
        _
    $region12: #{patchgan_discriminator.8} parent=5 // pred_fallthru
      _
    %p124 = scmp.lt.s32.totalorder %s9, 2
    // Predicated region
    $region21: #{patchgan_discriminator.8} parent=5 // pred_check
      %p125 = pneg %p124
    $region22: #{patchgan_discriminator.8} parent=5 // pred_check_branch
      %127 = sbr.rel (%p125) target = $region24
    $region23: #{patchgan_discriminator.8} parent=5 // pred_region
      // Predicated region
      $region25: #{patchgan_discriminator.8} parent=23 // pred_check
        %p128 = pneg %p29
      $region26: #{patchgan_discriminator.8} parent=23 // pred_check_branch
        %130 = sbr.rel (%p128) target = $region28
      $region27: #{patchgan_discriminator.8} parent=23 // pred_region
        %p131 = scmp.lt.s32.totalorder %s9, 1
        %s132 = scalar_select %p131, %s9, 1
        %s133 = smul.addr %s132, 64
        %s134 = smul.addr %s133, 8
        %s135 = scalar_lea.vmem %s0, %s134
      $region28: #{patchgan_discriminator.8} parent=23 // pred_fallthru
        _
    $region24: #{patchgan_discriminator.8} parent=5 // pred_fallthru
      _
    %p136 = scmp.le.s32.totalorder 1, %s9
    %p137 = scmp.lt.s32.totalorder %s9, 3
    %p138 = pnand %p136, %p137
    %p139 = pneg %p138
    // Predicated region
    $region29: #{patchgan_discriminator.8} parent=5 // pred_check
      _
    $region30: #{patchgan_discriminator.8} parent=5 // pred_check_branch
      %141 = sbr.rel (%p138) target = $region32
    $region31: #{patchgan_discriminator.8} parent=5 // pred_region
      %s142 = ssub.s32 %s9, 1
      %p143 = scmp.lt.s32.totalorder %s14, 1
      %s144 = scalar_select %p143, %s14, 1
      %s145 = smul.addr %s144, 64
      %s146 = smul.addr %s145, 8
      %s147 = scalar_lea.vmem %s0, %s146
      %p148 = pneg %p35
      %p149 = pneg %p32
      %p150 = pneg %p56
      %p151 = pneg %p53
      %p152 = pneg %p77
      %p153 = pneg %p74
      %p154 = pneg %p103
      %p155 = pneg %p100
      %p156 = scmp.lt.s32.totalorder %s14, 1
      %s157 = scalar_select %p156, %s14, 1
      %s158 = smul.addr %s157, 8
      %s159 = smul.addr %s158, 8
      %s160 = scalar_lea.vmem %s3, %s159
      %p161 = scmp.lt.s32.totalorder %s14, 1
      %s162 = scalar_select %p161, %s14, 1
      %s163 = smul.addr %s162, 64
      %s164 = smul.addr %s163, 8
      %s165 = scalar_lea.vmem %s0, %s164
      %p166 = scmp.lt.s32.totalorder %s14, 1
      %s167 = scalar_select %p166, %s14, 1
      %s168 = smul.addr %s167, 8
      %s169 = smul.addr %s168, 8
      %s170 = scalar_lea.vmem %s3, %s169
      %v171 = vld [vmem:[%s165] sm:$0xff]
      %v172 = vld [vmem:[%s165 + $0x8] sm:$0xff]
      %v173 = vld [vmem:[%s165 + $0x10] sm:$0xff]
      %v174 = vld [vmem:[%s165 + $0x18] sm:$0xff]
      %v175 = vld [vmem:[%s165 + $0x20] sm:$0xff]
      %v176 = vld [vmem:[%s165 + $0x28] sm:$0xff]
      %v177 = vld [vmem:[%s165 + $0x30] sm:$0xff]
      %v178 = vld [vmem:[%s165 + $0x38] sm:$0xff]
      %v179 = vld [vmem:[%s165 + $0x40] sm:$0xff]
      %v180 = vld [vmem:[%s165 + $0x48] sm:$0xff]
      %v181 = vld [vmem:[%s165 + $0x50] sm:$0xff]
      %v182 = vld [vmem:[%s165 + $0x58] sm:$0xff]
      %v183 = vld [vmem:[%s165 + $0x60] sm:$0xff]
      %v184 = vld [vmem:[%s165 + $0x68] sm:$0xff]
      %v185 = vld [vmem:[%s165 + $0x70] sm:$0xff]
      %v186 = vld [vmem:[%s165 + $0x78] sm:$0xff]
      %v187 = vld [vmem:[%s165 + $0x80] sm:$0xff]
      %v188 = vld [vmem:[%s165 + $0x88] sm:$0xff]
      %v189 = vld [vmem:[%s165 + $0x90] sm:$0xff]
      %v190 = vld [vmem:[%s165 + $0x98] sm:$0xff]
      %v191 = vld [vmem:[%s165 + $0xa0] sm:$0xff]
      %v192 = vld [vmem:[%s165 + $0xa8] sm:$0xff]
      %v193 = vld [vmem:[%s165 + $0xb0] sm:$0xff]
      %v194 = vld [vmem:[%s165 + $0xb8] sm:$0xff]
      %v195 = vld [vmem:[%s165 + $0xc0] sm:$0xff]
      %v196 = vld [vmem:[%s165 + $0xc8] sm:$0xff]
      %v197 = vld [vmem:[%s165 + $0xd0] sm:$0xff]
      %v198 = vld [vmem:[%s165 + $0xd8] sm:$0xff]
      %v199 = vld [vmem:[%s165 + $0xe0] sm:$0xff]
      %v200 = vld [vmem:[%s165 + $0xe8] sm:$0xff]
      %v201 = vld [vmem:[%s165 + $0xf0] sm:$0xff]
      %v202 = vld [vmem:[%s165 + $0xf8] sm:$0xff]
      %v203 = vld [vmem:[%s165 + $0x100] sm:$0xff]
      %v204 = vld [vmem:[%s165 + $0x108] sm:$0xff]
      %v205 = vld [vmem:[%s165 + $0x110] sm:$0xff]
      %v206 = vld [vmem:[%s165 + $0x118] sm:$0xff]
      %v207 = vld [vmem:[%s165 + $0x120] sm:$0xff]
      %v208 = vld [vmem:[%s165 + $0x128] sm:$0xff]
      %v209 = vld [vmem:[%s165 + $0x130] sm:$0xff]
      %v210 = vld [vmem:[%s165 + $0x138] sm:$0xff]
      %v211 = vld [vmem:[%s165 + $0x140] sm:$0xff]
      %v212 = vld [vmem:[%s165 + $0x148] sm:$0xff]
      %v213 = vld [vmem:[%s165 + $0x150] sm:$0xff]
      %v214 = vld [vmem:[%s165 + $0x158] sm:$0xff]
      %v215 = vld [vmem:[%s165 + $0x160] sm:$0xff]
      %v216 = vld [vmem:[%s165 + $0x168] sm:$0xff]
      %v217 = vld [vmem:[%s165 + $0x170] sm:$0xff]
      %v218 = vld [vmem:[%s165 + $0x178] sm:$0xff]
      %v219 = vld [vmem:[%s165 + $0x180] sm:$0xff]
      %v220 = vld [vmem:[%s165 + $0x188] sm:$0xff]
      %v221 = vld [vmem:[%s165 + $0x190] sm:$0xff]
      %v222 = vld [vmem:[%s165 + $0x198] sm:$0xff]
      %v223 = vld [vmem:[%s165 + $0x1a0] sm:$0xff]
      %v224 = vld [vmem:[%s165 + $0x1a8] sm:$0xff]
      %v225 = vld [vmem:[%s165 + $0x1b0] sm:$0xff]
      %v226 = vld [vmem:[%s165 + $0x1b8] sm:$0xff]
      %v227 = vld [vmem:[%s165 + $0x1c0] sm:$0xff]
      %v228 = vld [vmem:[%s165 + $0x1c8] sm:$0xff]
      %v229 = vld [vmem:[%s165 + $0x1d0] sm:$0xff]
      %v230 = vld [vmem:[%s165 + $0x1d8] sm:$0xff]
      %v231 = vld [vmem:[%s165 + $0x1e0] sm:$0xff]
      %v232 = vld [vmem:[%s165 + $0x1e8] sm:$0xff]
      %v233 = vld [vmem:[%s165 + $0x1f0] sm:$0xff]
      %v234 = vld [vmem:[%s165 + $0x1f8] sm:$0xff]
      %v235 = vld [vmem:[%s1] sm:$0xff]
      %v236 = vld [vmem:[%s1 + $0x8] sm:$0xff]
      %v237 = vld [vmem:[%s1 + $0x10] sm:$0xff]
      %v238 = vld [vmem:[%s1 + $0x18] sm:$0xff]
      %v239 = vld [vmem:[%s1 + $0x20] sm:$0xff]
      %v240 = vld [vmem:[%s1 + $0x28] sm:$0xff]
      %v241 = vld [vmem:[%s1 + $0x30] sm:$0xff]
      %v242 = vld [vmem:[%s1 + $0x38] sm:$0xff]
      %v243 = vld [vmem:[%s1 + $0x40] sm:$0xff]
      %v244 = vld [vmem:[%s1 + $0x48] sm:$0xff]
      %v245 = vld [vmem:[%s1 + $0x50] sm:$0xff]
      %v246 = vld [vmem:[%s1 + $0x58] sm:$0xff]
      %v247 = vld [vmem:[%s1 + $0x60] sm:$0xff]
      %v248 = vld [vmem:[%s1 + $0x68] sm:$0xff]
      %v249 = vld [vmem:[%s1 + $0x70] sm:$0xff]
      %v250 = vld [vmem:[%s1 + $0x78] sm:$0xff]
      %v251 = vld [vmem:[%s1 + $0x80] sm:$0xff]
      %v252 = vld [vmem:[%s1 + $0x88] sm:$0xff]
      %v253 = vld [vmem:[%s1 + $0x90] sm:$0xff]
      %v254 = vld [vmem:[%s1 + $0x98] sm:$0xff]
      %v255 = vld [vmem:[%s1 + $0xa0] sm:$0xff]
      %v256 = vld [vmem:[%s1 + $0xa8] sm:$0xff]
      %v257 = vld [vmem:[%s1 + $0xb0] sm:$0xff]
      %v258 = vld [vmem:[%s1 + $0xb8] sm:$0xff]
      %v259 = vld [vmem:[%s1 + $0xc0] sm:$0xff]
      %v260 = vld [vmem:[%s1 + $0xc8] sm:$0xff]
      %v261 = vld [vmem:[%s1 + $0xd0] sm:$0xff]
      %v262 = vld [vmem:[%s1 + $0xd8] sm:$0xff]
      %v263 = vld [vmem:[%s1 + $0xe0] sm:$0xff]
      %v264 = vld [vmem:[%s1 + $0xe8] sm:$0xff]
      %v265 = vld [vmem:[%s1 + $0xf0] sm:$0xff]
      %v266 = vld [vmem:[%s1 + $0xf8] sm:$0xff]
      %v267 = vld [vmem:[%s2] sm:$0xff]
      %v268 = vld [vmem:[%s2 + $0x8] sm:$0xff]
      %v269 = vld [vmem:[%s2 + $0x10] sm:$0xff]
      %v270 = vld [vmem:[%s2 + $0x18] sm:$0xff]
      %v271 = vld [vmem:[%s2 + $0x20] sm:$0xff]
      %v272 = vld [vmem:[%s2 + $0x28] sm:$0xff]
      %v273 = vld [vmem:[%s2 + $0x30] sm:$0xff]
      %v274 = vld [vmem:[%s2 + $0x38] sm:$0xff]
      %276 = vset.pattern.permute.xlu0 0
      %277 = vperm.xlu0 %276, %v267
      %v278 = vpop.permute.xlu0 %277
      %281 = vset.pattern.permute.xlu0 0
      %282 = vperm.xlu0 %281, %v268
      %v283 = vpop.permute.xlu0 %282
      %286 = vset.pattern.permute.xlu0 0
      %287 = vperm.xlu0 %286, %v269
      %v288 = vpop.permute.xlu0 %287
      %291 = vset.pattern.permute.xlu0 0
      %292 = vperm.xlu0 %291, %v270
      %v293 = vpop.permute.xlu0 %292
      %296 = vset.pattern.permute.xlu0 0
      %297 = vperm.xlu0 %296, %v271
      %v298 = vpop.permute.xlu0 %297
      %301 = vset.pattern.permute.xlu0 0
      %302 = vperm.xlu0 %301, %v272
      %v303 = vpop.permute.xlu0 %302
      %306 = vset.pattern.permute.xlu0 0
      %307 = vperm.xlu0 %306, %v273
      %v308 = vpop.permute.xlu0 %307
      %311 = vset.pattern.permute.xlu0 0
      %312 = vperm.xlu0 %311, %v274
      %v313 = vpop.permute.xlu0 %312
      %315 = vmatprep.subr.mxu0 0.0
      %316 = vmatpush1.msra.mxu0 %v171
      %317 = vmatprep.subr.mxu0 0.0
      %318 = vmatpush1.msra.mxu0 %v172
      %319 = vmatprep.subr.mxu0 0.0
      %320 = vmatpush1.msra.mxu0 %v173
      %321 = vmatprep.subr.mxu0 0.0
      %322 = vmatpush1.msra.mxu0 %v174
      %323 = vmatprep.subr.mxu0 0.0
      %324 = vmatpush1.msra.mxu0 %v175
      %325 = vmatprep.subr.mxu0 0.0
      %326 = vmatpush1.msra.mxu0 %v176
      %327 = vmatprep.subr.mxu0 0.0
      %328 = vmatpush1.msra.mxu0 %v177
      %329 = vmatprep.subr.mxu0 0.0
      %330 = vmatpush1.msra.mxu0 %v178
      %331 = vmatprep.subr.mxu0 0.0
      %332 = vmatpush1.msra.mxu0 %v179
      %333 = vmatprep.subr.mxu0 0.0
      %334 = vmatpush1.msra.mxu0 %v180
      %335 = vmatprep.subr.mxu0 0.0
      %336 = vmatpush1.msra.mxu0 %v181
      %337 = vmatprep.subr.mxu0 0.0
      %338 = vmatpush1.msra.mxu0 %v182
      %339 = vmatprep.subr.mxu0 0.0
      %340 = vmatpush1.msra.mxu0 %v183
      %341 = vmatprep.subr.mxu0 0.0
      %342 = vmatpush1.msra.mxu0 %v184
      %343 = vmatprep.subr.mxu0 0.0
      %344 = vmatpush1.msra.mxu0 %v185
      %345 = vmatprep.subr.mxu0 0.0
      %346 = vmatpush1.msra.mxu0 %v186
      %347 = vmatprep.subr.mxu0 0.0
      %348 = vmatpush1.msra.mxu0 %v187
      %349 = vmatprep.subr.mxu0 0.0
      %350 = vmatpush1.msra.mxu0 %v188
      %351 = vmatprep.subr.mxu0 0.0
      %352 = vmatpush1.msra.mxu0 %v189
      %353 = vmatprep.subr.mxu0 0.0
      %354 = vmatpush1.msra.mxu0 %v190
      %355 = vmatprep.subr.mxu0 0.0
      %356 = vmatpush1.msra.mxu0 %v191
      %357 = vmatprep.subr.mxu0 0.0
      %358 = vmatpush1.msra.mxu0 %v192
      %359 = vmatprep.subr.mxu0 0.0
      %360 = vmatpush1.msra.mxu0 %v193
      %361 = vmatprep.subr.mxu0 0.0
      %362 = vmatpush1.msra.mxu0 %v194
      %363 = vmatprep.subr.mxu0 0.0
      %364 = vmatpush1.msra.mxu0 %v195
      %365 = vmatprep.subr.mxu0 0.0
      %366 = vmatpush1.msra.mxu0 %v196
      %367 = vmatprep.subr.mxu0 0.0
      %368 = vmatpush1.msra.mxu0 %v197
      %369 = vmatprep.subr.mxu0 0.0
      %370 = vmatpush1.msra.mxu0 %v198
      %371 = vmatprep.subr.mxu0 0.0
      %372 = vmatpush1.msra.mxu0 %v199
      %373 = vmatprep.subr.mxu0 0.0
      %374 = vmatpush1.msra.mxu0 %v200
      %375 = vmatprep.subr.mxu0 0.0
      %376 = vmatpush1.msra.mxu0 %v201
      %377 = vmatprep.subr.mxu0 0.0
      %378 = vmatpush1.msra.mxu0 %v202
      %379 = vmatprep.mubr.f32.mxu0 %v236
      %380 = vmatmul.mubr.f32.gmra.mrb[0].mxu0 %v235
      %v381 = vpop.f32.mrb[0].mxu0
      %v382 = vadd.f32 %v278, %v381
      %v383 = vpop.f32.mrb[0].mxu0
      %384 = vmatprep.mubr.f32.mxu0 %v240
      %385 = vmatmul.mubr.f32.gmra.mrb[0].mxu0 %v239
      %v386 = vpop.f32.mrb[0].mxu0
      %v387 = vadd.f32 %v283, %v386
      %v388 = vpop.f32.mrb[0].mxu0
      %389 = vmatprep.mubr.f32.mxu0 %v244
      %390 = vmatmul.mubr.f32.gmra.mrb[0].mxu0 %v243
      %v391 = vpop.f32.mrb[0].mxu0
      %v392 = vadd.f32 %v288, %v391
      %v393 = vpop.f32.mrb[0].mxu0
      %394 = vmatprep.mubr.f32.mxu0 %v248
      %395 = vmatmul.mubr.f32.gmra.mrb[0].mxu0 %v247
      %v396 = vpop.f32.mrb[0].mxu0
      %v397 = vadd.f32 %v293, %v396
      %v398 = vpop.f32.mrb[0].mxu0
      %399 = vmatprep.mubr.f32.mxu0 %v252
      %400 = vmatmul.mubr.f32.gmra.mrb[0].mxu0 %v251
      %v401 = vpop.f32.mrb[0].mxu0
      %v402 = vadd.f32 %v298, %v401
      %v403 = vpop.f32.mrb[0].mxu0
      %404 = vmatprep.mubr.f32.mxu0 %v256
      %405 = vmatmul.mubr.f32.gmra.mrb[0].mxu0 %v255
      %v406 = vpop.f32.mrb[0].mxu0
      %v407 = vadd.f32 %v303, %v406
      %v408 = vpop.f32.mrb[0].mxu0
      %409 = vmatprep.mubr.f32.mxu0 %v260
      %410 = vmatmul.mubr.f32.gmra.mrb[0].mxu0 %v259
      %v411 = vpop.f32.mrb[0].mxu0
      %v412 = vadd.f32 %v308, %v411
      %v413 = vpop.f32.mrb[0].mxu0
      %414 = vmatprep.mubr.f32.mxu0 %v264
      %415 = vmatmul.mubr.f32.gmra.mrb[0].mxu0 %v263
      %v416 = vpop.f32.mrb[0].mxu0
      %v417 = vadd.f32 %v313, %v416
      %v418 = vpop.f32.mrb[0].mxu0
      %419 = vdwg.mxu0
      %420 = vmatprep.subr.mxu0 0.0
      %421 = vmatpush1.msra.mxu0 %v203
      %422 = vmatprep.subr.mxu0 0.0
      %423 = vmatpush1.msra.mxu0 %v204
      %424 = vmatprep.subr.mxu0 0.0
      %425 = vmatpush1.msra.mxu0 %v205
      %426 = vmatprep.subr.mxu0 0.0
      %427 = vmatpush1.msra.mxu0 %v206
      %428 = vmatprep.subr.mxu0 0.0
      %429 = vmatpush1.msra.mxu0 %v207
      %430 = vmatprep.subr.mxu0 0.0
      %431 = vmatpush1.msra.mxu0 %v208
      %432 = vmatprep.subr.mxu0 0.0
      %433 = vmatpush1.msra.mxu0 %v209
      %434 = vmatprep.subr.mxu0 0.0
      %435 = vmatpush1.msra.mxu0 %v210
      %436 = vmatprep.subr.mxu0 0.0
      %437 = vmatpush1.msra.mxu0 %v211
      %438 = vmatprep.subr.mxu0 0.0
      %439 = vmatpush1.msra.mxu0 %v212
      %440 = vmatprep.subr.mxu0 0.0
      %441 = vmatpush1.msra.mxu0 %v213
      %442 = vmatprep.subr.mxu0 0.0
      %443 = vmatpush1.msra.mxu0 %v214
      %444 = vmatprep.subr.mxu0 0.0
      %445 = vmatpush1.msra.mxu0 %v215
      %446 = vmatprep.subr.mxu0 0.0
      %447 = vmatpush1.msra.mxu0 %v216
      %448 = vmatprep.subr.mxu0 0.0
      %449 = vmatpush1.msra.mxu0 %v217
      %450 = vmatprep.subr.mxu0 0.0
      %451 = vmatpush1.msra.mxu0 %v218
      %452 = vmatprep.subr.mxu0 0.0
      %453 = vmatpush1.msra.mxu0 %v219
      %454 = vmatprep.subr.mxu0 0.0
      %455 = vmatpush1.msra.mxu0 %v220
      %456 = vmatprep.subr.mxu0 0.0
      %457 = vmatpush1.msra.mxu0 %v221
      %458 = vmatprep.subr.mxu0 0.0
      %459 = vmatpush1.msra.mxu0 %v222
      %460 = vmatprep.subr.mxu0 0.0
      %461 = vmatpush1.msra.mxu0 %v223
      %462 = vmatprep.subr.mxu0 0.0
      %463 = vmatpush1.msra.mxu0 %v224
      %464 = vmatprep.subr.mxu0 0.0
      %465 = vmatpush1.msra.mxu0 %v225
      %466 = vmatprep.subr.mxu0 0.0
      %467 = vmatpush1.msra.mxu0 %v226
      %468 = vmatprep.subr.mxu0 0.0
      %469 = vmatpush1.msra.mxu0 %v227
      %470 = vmatprep.subr.mxu0 0.0
      %471 = vmatpush1.msra.mxu0 %v228
      %472 = vmatprep.subr.mxu0 0.0
      %473 = vmatpush1.msra.mxu0 %v229
      %474 = vmatprep.subr.mxu0 0.0
      %475 = vmatpush1.msra.mxu0 %v230
      %476 = vmatprep.subr.mxu0 0.0
      %477 = vmatpush1.msra.mxu0 %v231
      %478 = vmatprep.subr.mxu0 0.0
      %479 = vmatpush1.msra.mxu0 %v232
      %480 = vmatprep.subr.mxu0 0.0
      %481 = vmatpush1.msra.mxu0 %v233
      %482 = vmatprep.subr.mxu0 0.0
      %483 = vmatpush1.msra.mxu0 %v234
      %484 = vmatprep.mubr.f32.mxu0 %v238
      %485 = vmatmul.mubr.f32.gmra.mrb[0].mxu0 %v237
      %v486 = vpop.f32.mrb[0].mxu0
      %v487 = vadd.f32 %v382, %v486
      %v488 = vpop.f32.mrb[0].mxu0
      %489 = vmatprep.mubr.f32.mxu0 %v242
      %490 = vmatmul.mubr.f32.gmra.mrb[0].mxu0 %v241
      %v491 = vpop.f32.mrb[0].mxu0
      %v492 = vadd.f32 %v387, %v491
      %v493 = vpop.f32.mrb[0].mxu0
      %494 = vmatprep.mubr.f32.mxu0 %v246
      %495 = vmatmul.mubr.f32.gmra.mrb[0].mxu0 %v245
      %v496 = vpop.f32.mrb[0].mxu0
      %v497 = vadd.f32 %v392, %v496
      %v498 = vpop.f32.mrb[0].mxu0
      %499 = vmatprep.mubr.f32.mxu0 %v250
      %500 = vmatmul.mubr.f32.gmra.mrb[0].mxu0 %v249
      %v501 = vpop.f32.mrb[0].mxu0
      %v502 = vadd.f32 %v397, %v501
      %v503 = vpop.f32.mrb[0].mxu0
      %504 = vmatprep.mubr.f32.mxu0 %v254
      %505 = vmatmul.mubr.f32.gmra.mrb[0].mxu0 %v253
      %v506 = vpop.f32.mrb[0].mxu0
      %v507 = vadd.f32 %v402, %v506
      %v508 = vpop.f32.mrb[0].mxu0
      %509 = vmatprep.mubr.f32.mxu0 %v258
      %510 = vmatmul.mubr.f32.gmra.mrb[0].mxu0 %v257
      %v511 = vpop.f32.mrb[0].mxu0
      %v512 = vadd.f32 %v407, %v511
      %v513 = vpop.f32.mrb[0].mxu0
      %514 = vmatprep.mubr.f32.mxu0 %v262
      %515 = vmatmul.mubr.f32.gmra.mrb[0].mxu0 %v261
      %v516 = vpop.f32.mrb[0].mxu0
      %v517 = vadd.f32 %v412, %v516
      %v518 = vpop.f32.mrb[0].mxu0
      %519 = vmatprep.mubr.f32.mxu0 %v266
      %520 = vmatmul.mubr.f32.gmra.mrb[0].mxu0 %v265
      %v521 = vpop.f32.mrb[0].mxu0
      %v522 = vadd.f32 %v417, %v521
      %v523 = vpop.f32.mrb[0].mxu0
      %524 = vdwg.mxu0
      %vm525 = vcmask 72704
      %v526 = vsel %vm525, %v487, 0.0
      %527 = vadd.xlane.f32.xlu0 %v526
      %v528 = vpop.xlane.xlu0 %527
      %v529 = vsel %vm525, %v492, 0.0
      %530 = vadd.xlane.f32.xlu0 %v529
      %v531 = vpop.xlane.xlu0 %530
      %v532 = vsel %vm525, %v497, 0.0
      %533 = vadd.xlane.f32.xlu0 %v532
      %v534 = vpop.xlane.xlu0 %533
      %v535 = vsel %vm525, %v502, 0.0
      %536 = vadd.xlane.f32.xlu0 %v535
      %v537 = vpop.xlane.xlu0 %536
      %v538 = vsel %vm525, %v507, 0.0
      %539 = vadd.xlane.f32.xlu0 %v538
      %v540 = vpop.xlane.xlu0 %539
      %v541 = vsel %vm525, %v512, 0.0
      %542 = vadd.xlane.f32.xlu0 %v541
      %v543 = vpop.xlane.xlu0 %542
      %v544 = vsel %vm525, %v517, 0.0
      %545 = vadd.xlane.f32.xlu0 %v544
      %v546 = vpop.xlane.xlu0 %545
      %v547 = vsel %vm525, %v522, 0.0
      %548 = vadd.xlane.f32.xlu0 %v547
      %v549 = vpop.xlane.xlu0 %548
      %v550 = vrcp.pop 9.0
      %v551 = vmul.f32 %v528, %v550
      %v552 = vmul.f32 %v531, %v550
      %v553 = vmul.f32 %v534, %v550
      %v554 = vmul.f32 %v537, %v550
      %v555 = vmul.f32 %v540, %v550
      %v556 = vmul.f32 %v543, %v550
      %v557 = vmul.f32 %v546, %v550
      %v558 = vmul.f32 %v549, %v550
      %v559 = vsub.f32 %v487, %v551
      %v560 = vsub.f32 %v492, %v552
      %v561 = vsub.f32 %v497, %v553
      %v562 = vsub.f32 %v502, %v554
      %v563 = vsub.f32 %v507, %v555
      %v564 = vsub.f32 %v512, %v556
      %v565 = vsub.f32 %v517, %v557
      %v566 = vsub.f32 %v522, %v558
      %v567 = vmul.f32 %v559, %v559
      %v568 = vmul.f32 %v560, %v560
      %v569 = vmul.f32 %v561, %v561
      %v570 = vmul.f32 %v562, %v562
      %v571 = vmul.f32 %v563, %v563
      %v572 = vmul.f32 %v564, %v564
      %v573 = vmul.f32 %v565, %v565
      %v574 = vmul.f32 %v566, %v566
      %v575 = vsel %vm525, %v567, 0.0
      %576 = vadd.xlane.f32.xlu0 %v575
      %v577 = vpop.xlane.xlu0 %576
      %v578 = vsel %vm525, %v568, 0.0
      %579 = vadd.xlane.f32.xlu0 %v578
      %v580 = vpop.xlane.xlu0 %579
      %v581 = vsel %vm525, %v569, 0.0
      %582 = vadd.xlane.f32.xlu0 %v581
      %v583 = vpop.xlane.xlu0 %582
      %v584 = vsel %vm525, %v570, 0.0
      %585 = vadd.xlane.f32.xlu0 %v584
      %v586 = vpop.xlane.xlu0 %585
      %v587 = vsel %vm525, %v571, 0.0
      %588 = vadd.xlane.f32.xlu0 %v587
      %v589 = vpop.xlane.xlu0 %588
      %v590 = vsel %vm525, %v572, 0.0
      %591 = vadd.xlane.f32.xlu0 %v590
      %v592 = vpop.xlane.xlu0 %591
      %v593 = vsel %vm525, %v573, 0.0
      %594 = vadd.xlane.f32.xlu0 %v593
      %v595 = vpop.xlane.xlu0 %594
      %v596 = vsel %vm525, %v574, 0.0
      %597 = vadd.xlane.f32.xlu0 %v596
      %v598 = vpop.xlane.xlu0 %597
      %v599 = vmul.f32 %v577, %v550
      %v600 = vmul.f32 %v580, %v550
      %v601 = vmul.f32 %v583, %v550
      %v602 = vmul.f32 %v586, %v550
      %v603 = vmul.f32 %v589, %v550
      %v604 = vmul.f32 %v592, %v550
      %v605 = vmul.f32 %v595, %v550
      %v606 = vmul.f32 %v598, %v550
      %v607 = vadd.f32 %v599, 1e-05
      %v608 = vadd.f32 %v600, 1e-05
      %v609 = vadd.f32 %v601, 1e-05
      %v610 = vadd.f32 %v602, 1e-05
      %v611 = vadd.f32 %v603, 1e-05
      %v612 = vadd.f32 %v604, 1e-05
      %v613 = vadd.f32 %v605, 1e-05
      %v614 = vadd.f32 %v606, 1e-05
      %v615 = vrsqrt.pop %v607
      %v616 = vrsqrt.pop %v608
      %v617 = vrsqrt.pop %v609
      %v618 = vrsqrt.pop %v610
      %v619 = vrsqrt.pop %v611
      %v620 = vrsqrt.pop %v612
      %v621 = vrsqrt.pop %v613
      %v622 = vrsqrt.pop %v614
      %v623 = vmul.f32 %v559, %v615
      %v624 = vmul.f32 %v560, %v616
      %v625 = vmul.f32 %v561, %v617
      %v626 = vmul.f32 %v562, %v618
      %v627 = vmul.f32 %v563, %v619
      %v628 = vmul.f32 %v564, %v620
      %v629 = vmul.f32 %v565, %v621
      %v630 = vmul.f32 %v566, %v622
      %vm631 = vcmp.ge.f32.partialorder %v623, 0.0
      %vm632 = vcmp.ge.f32.partialorder %v624, 0.0
      %vm633 = vcmp.ge.f32.partialorder %v625, 0.0
      %vm634 = vcmp.ge.f32.partialorder %v626, 0.0
      %vm635 = vcmp.ge.f32.partialorder %v627, 0.0
      %vm636 = vcmp.ge.f32.partialorder %v628, 0.0
      %vm637 = vcmp.ge.f32.partialorder %v629, 0.0
      %vm638 = vcmp.ge.f32.partialorder %v630, 0.0
      %v639 = vmul.f32 %v623, 0.2
      %v640 = vmul.f32 %v624, 0.2
      %v641 = vmul.f32 %v625, 0.2
      %v642 = vmul.f32 %v626, 0.2
      %v643 = vmul.f32 %v627, 0.2
      %v644 = vmul.f32 %v628, 0.2
      %v645 = vmul.f32 %v629, 0.2
      %v646 = vmul.f32 %v630, 0.2
      %v647 = vsel %vm631, %v623, %v639
      %v648 = vsel %vm632, %v624, %v640
      %v649 = vsel %vm633, %v625, %v641
      %v650 = vsel %vm634, %v626, %v642
      %v651 = vsel %vm635, %v627, %v643
      %v652 = vsel %vm636, %v628, %v644
      %v653 = vsel %vm637, %v629, %v645
      %v654 = vsel %vm638, %v630, %v646
      %655 = vst.msk [vmem:[%s170] sm:$0xff] %vm525, %v647
      %656 = vst.msk [vmem:[%s170 + $0x8] sm:$0xff] %vm525, %v648
      %657 = vst.msk [vmem:[%s170 + $0x10] sm:$0xff] %vm525, %v649
      %658 = vst.msk [vmem:[%s170 + $0x18] sm:$0xff] %vm525, %v650
      %659 = vst.msk [vmem:[%s170 + $0x20] sm:$0xff] %vm525, %v651
      %660 = vst.msk [vmem:[%s170 + $0x28] sm:$0xff] %vm525, %v652
      %661 = vst.msk [vmem:[%s170 + $0x30] sm:$0xff] %vm525, %v653
      %662 = vst.msk [vmem:[%s170 + $0x38] sm:$0xff] %vm525, %v654
      %p663 = scmp.lt.s32.totalorder %s14, 1
      %s664 = scalar_select %p663, %s14, 1
      %s665 = smul.addr %s664, 8
      %s666 = smul.addr %s665, 8
      %s667 = scalar_lea.vmem %s3, %s666
      // Predicated region
      $region33: #{patchgan_discriminator.8} parent=31 // pred_check
        %p668 = pneg %p100
      $region34: #{patchgan_discriminator.8} parent=31 // pred_check_branch
        %670 = sbr.rel (%p668) target = $region36
      $region35: #{patchgan_discriminator.8} parent=31 // pred_region
        _
      $region36: #{patchgan_discriminator.8} parent=31 // pred_fallthru
        _
    $region32: #{patchgan_discriminator.8} parent=5 // pred_fallthru
      _
    %p671 = scmp.le.s32.totalorder 2, %s9
    // Predicated region
    $region37: #{patchgan_discriminator.8} parent=5 // pred_check
      %p672 = pneg %p671
    $region38: #{patchgan_discriminator.8} parent=5 // pred_check_branch
      %674 = sbr.rel (%p672) target = $region40
    $region39: #{patchgan_discriminator.8} parent=5 // pred_region
      %s675 = ssub.s32 %s9, 2
      // Predicated region
      $region41: #{patchgan_discriminator.8} parent=39 // pred_check
        %p676 = pneg %p106
      $region42: #{patchgan_discriminator.8} parent=39 // pred_check_branch
        %678 = sbr.rel (%p676) target = $region44
      $region43: #{patchgan_discriminator.8} parent=39 // pred_region
        %p679 = scmp.lt.s32.totalorder %s15, 1
        %s680 = scalar_select %p679, %s15, 1
        %s681 = smul.addr %s680, 8
        %s682 = smul.addr %s681, 8
        %s683 = scalar_lea.vmem %s3, %s682
      $region44: #{patchgan_discriminator.8} parent=39 // pred_fallthru
        _
    $region40: #{patchgan_discriminator.8} parent=5 // pred_fallthru
      _
  $region6: #{patchgan_discriminator.8} parent=0 // loop_footer
    %s13 = sadd.s32 1, %s9
  $region7: #{patchgan_discriminator.8} parent=0 // loop_footer_branch
    %8 = sbr.rel target = $region3
  $region8: #{patchgan_discriminator.8} parent=0 // loop_exit
    _

// kernel: patchgan_discriminator.9
$region0: #{patchgan_discriminator.9}
  #allocation0 [shape = 'u32[]', space=smem, size = 0x4, offset = 0x4, fixed_abs, tag = 'smem constant byte address 0x4 - core index']
  #allocation1 [shape = 'u32[144,128]{1,0:T(1,128)}', space=vmem, size = 0x12000, scoped, tag = 'internal scratch']
  #allocation2 [shape = 'f32[1,1]{1,0:T(1,128)S(1)}', space=vmem, size = 0x200, scoped, tag = 'scoped memory for patchgan_discriminator.9']
  %s0 = inlined_call_operand.vmem [shape: f32[2,1024,4], index: 0, kind: input, shape index: {}]
  %s1 = inlined_call_operand.vmem [shape: f32[1,1024], index: 1, kind: input, shape index: {}]
  %s2 = inlined_call_operand.<no memory space> [shape: f32[1,1], index: 2, kind: input, shape index: {}]
  %s3 = inlined_call_operand.vmem [shape: f32[2,1,4], index: 3, kind: output, shape index: {}]
  %s4 = sld [smem:[#allocation0]]
  $region45: #{patchgan_discriminator.9} parent=0
    _
  %s6 = ssub.s32 1, %s4
  %s7 = scalar_select 0, %s6, %s4
  %v8 = vstv %s2
  %9 = vst [vmem:[#allocation2] sm:$0x1] %v8
  loop: start=0, step=1, limit=4
  $region2: #{patchgan_discriminator.9} parent=0 // loop_pre_header
    _
  $region3: #{patchgan_discriminator.9} parent=0 // loop_header
    %s11 = sphi 0, %s15
    %p12 = scmp.ge.s32.totalorder %s11, 4
    %s21 = sphi 0, %s23
    %s24 = sphi 0, %s21
    %s25 = sphi 0, %s24
    %s41 = sphi 0, %s25
    %s45 = sphi 0, %s45
    %s47 = sphi 0, %s45
    %s48 = sphi 0, %s47
    %s62 = sphi 0, %s48
    %s66 = sphi 0, %s66
    %s68 = sphi 0, %s66
    %s69 = sphi 0, %s68
    %s83 = sphi 0, %s69
    %s89 = sphi 0, %s91
    %s92 = sphi 0, %s89
    %s93 = sphi 0, %s92
    %s109 = sphi 0, %s93
  $region4: #{patchgan_discriminator.9} parent=0 // loop_header_branch
    %14 = sbr.rel (%p12) target = $region8
  $region5: #{patchgan_discriminator.9} parent=0 // loop_body
    %s16 = ssub.s32 %s11, 1
    %s17 = ssub.s32 %s11, 2
    %s18 = sadd.s32 %s11, 1
    %s19 = ssub.s32 %s11, %s18
    %p20 = scmp.eq.s32.totalorder %s19, 0
    %s22 = sadd.s32 %s21, 1
    %s23 = scalar_select %p20, %s21, %s22
    %p26 = pneg %p20
    %p27 = scmp.eq.s32.totalorder %s11, 1
    %p28 = por %p26, %p27
    %p29 = scmp.ne.s32.totalorder %s21, %s24
    %p30 = scmp.eq.s32.totalorder %s11, 0
    %p31 = por %p29, %p30
    %p32 = scmp.ne.s32.totalorder %s21, %s24
    %p33 = scmp.eq.s32.totalorder %s16, 1
    %p34 = por %p32, %p33
    %p35 = scmp.ne.s32.totalorder %s24, %s25
    %p36 = scmp.eq.s32.totalorder %s16, 0
    %p37 = por %p35, %p36
    %p38 = scmp.ne.s32.totalorder %s24, %s25
    %p39 = scmp.eq.s32.totalorder %s17, 1
    %p40 = por %p38, %p39
    %p42 = scmp.ne.s32.totalorder %s25, %s41
    %p43 = scmp.eq.s32.totalorder %s17, 0
    %p44 = por %p42, %p43
    %s46 = sadd.s32 %s45, 1
    %p49 = scmp.eq.s32.totalorder %s11, 1
    %p50 = scmp.ne.s32.totalorder %s45, %s47
    %p51 = scmp.eq.s32.totalorder %s11, 0
    %p52 = por %p50, %p51
    %p53 = scmp.ne.s32.totalorder %s45, %s47
    %p54 = scmp.eq.s32.totalorder %s16, 1
    %p55 = por %p53, %p54
    %p56 = scmp.ne.s32.totalorder %s47, %s48
    %p57 = scmp.eq.s32.totalorder %s16, 0
    %p58 = por %p56, %p57
    %p59 = scmp.ne.s32.totalorder %s47, %s48
    %p60 = scmp.eq.s32.totalorder %s17, 1
    %p61 = por %p59, %p60
    %p63 = scmp.ne.s32.totalorder %s48, %s62
    %p64 = scmp.eq.s32.totalorder %s17, 0
    %p65 = por %p63, %p64
    %s67 = sadd.s32 %s66, 1
    %p70 = scmp.eq.s32.totalorder %s11, 1
    %p71 = scmp.ne.s32.totalorder %s66, %s68
    %p72 = scmp.eq.s32.totalorder %s11, 0
    %p73 = por %p71, %p72
    %p74 = scmp.ne.s32.totalorder %s66, %s68
    %p75 = scmp.eq.s32.totalorder %s16, 1
    %p76 = por %p74, %p75
    %p77 = scmp.ne.s32.totalorder %s68, %s69
    %p78 = scmp.eq.s32.totalorder %s16, 0
    %p79 = por %p77, %p78
    %p80 = scmp.ne.s32.totalorder %s68, %s69
    %p81 = scmp.eq.s32.totalorder %s17, 1
    %p82 = por %p80, %p81
    %p84 = scmp.ne.s32.totalorder %s69, %s83
    %p85 = scmp.eq.s32.totalorder %s17, 0
    %p86 = por %p84, %p85
    %s87 = ssub.s32 %s11, %s18
    %p88 = scmp.eq.s32.totalorder %s87, 0
    %s90 = sadd.s32 %s89, 1
    %s91 = scalar_select %p88, %s89, %s90
    %p94 = pneg %p88
    %p95 = scmp.eq.s32.totalorder %s11, 1
    %p96 = por %p94, %p95
    %p97 = scmp.ne.s32.totalorder %s89, %s92
    %p98 = scmp.eq.s32.totalorder %s11, 0
    %p99 = por %p97, %p98
    %p100 = scmp.ne.s32.totalorder %s89, %s92
    %p101 = scmp.eq.s32.totalorder %s16, 1
    %p102 = por %p100, %p101
    %p103 = scmp.ne.s32.totalorder %s92, %s93
    %p104 = scmp.eq.s32.totalorder %s16, 0
    %p105 = por %p103, %p104
    %p106 = scmp.ne.s32.totalorder %s92, %s93
    %p107 = scmp.eq.s32.totalorder %s17, 1
    %p108 = por %p106, %p107
    %p110 = scmp.ne.s32.totalorder %s93, %s109
    %p111 = scmp.eq.s32.totalorder %s17, 0
    %p112 = por %p110, %p111
    %p113 = scmp.le.s32.totalorder 1, %s11
    %p114 = scmp.lt.s32.totalorder %s11, 3
    %p115 = pnand %p113, %p114
    %p116 = pneg %p115
    // Predicated region
    $region9: #{patchgan_discriminator.9} parent=5 // pred_check
      _
    $region10: #{patchgan_discriminator.9} parent=5 // pred_check_branch
      %118 = sbr.rel (%p115) target = $region12
    $region11: #{patchgan_discriminator.9} parent=5 // pred_region
      %s119 = ssub.s32 %s11, 1
      // Predicated region
      $region13: #{patchgan_discriminator.9} parent=11 // pred_check
        %p120 = pneg %p58
      $region14: #{patchgan_discriminator.9} parent=11 // pred_check_branch
        %122 = sbr.rel (%p120) target = $region16
      $region15: #{patchgan_discriminator.9} parent=11 // pred_region
        _
      $region16: #{patchgan_discriminator.9} parent=11 // pred_fallthru
        _
      // Predicated region
      $region17: #{patchgan_discriminator.9} parent=11 // pred_check
        %p123 = pneg %p79
      $region18: #{patchgan_discriminator.9} parent=11 // pred_check_branch
        %125 = sbr.rel (%p123) target = $region20
      $region19: #{patchgan_discriminator.9} parent=11 // pred_region
        _
      $region20: #{patchgan_discriminator.9} parent=11 // pred_fallthru
        _
    $region12: #{patchgan_discriminator.9} parent=5 // pred_fallthru
      _
    %p126 = scmp.lt.s32.totalorder %s11, 2
    // Predicated region
    $region21: #{patchgan_discriminator.9} parent=5 // pred_check
      %p127 = pneg %p126
    $region22: #{patchgan_discriminator.9} parent=5 // pred_check_branch
      %129 = sbr.rel (%p127) target = $region24
    $region23: #{patchgan_discriminator.9} parent=5 // pred_region
      // Predicated region
      $region25: #{patchgan_discriminator.9} parent=23 // pred_check
        %p130 = pneg %p31
      $region26: #{patchgan_discriminator.9} parent=23 // pred_check_branch
        %132 = sbr.rel (%p130) target = $region28
      $region27: #{patchgan_discriminator.9} parent=23 // pred_region
        %p133 = scmp.lt.s32.totalorder %s11, 1
        %s134 = scalar_select %p133, %s11, 1
        %s135 = smul.addr %s134, 128
        %s136 = smul.addr %s135, 8
        %s137 = scalar_lea.vmem %s0, %s136
      $region28: #{patchgan_discriminator.9} parent=23 // pred_fallthru
        _
    $region24: #{patchgan_discriminator.9} parent=5 // pred_fallthru
      _
    %p138 = scmp.le.s32.totalorder 1, %s11
    %p139 = scmp.lt.s32.totalorder %s11, 3
    %p140 = pnand %p138, %p139
    %p141 = pneg %p140
    // Predicated region
    $region29: #{patchgan_discriminator.9} parent=5 // pred_check
      _
    $region30: #{patchgan_discriminator.9} parent=5 // pred_check_branch
      %143 = sbr.rel (%p140) target = $region32
    $region31: #{patchgan_discriminator.9} parent=5 // pred_region
      %s144 = ssub.s32 %s11, 1
      %p145 = scmp.lt.s32.totalorder %s16, 1
      %s146 = scalar_select %p145, %s16, 1
      %s147 = smul.addr %s146, 128
      %s148 = smul.addr %s147, 8
      %s149 = scalar_lea.vmem %s0, %s148
      %p150 = pneg %p37
      %p151 = pneg %p34
      %p152 = pneg %p58
      %p153 = pneg %p55
      %p154 = pneg %p79
      %p155 = pneg %p76
      %p156 = pneg %p105
      %p157 = pneg %p102
      %p158 = scmp.lt.s32.totalorder %s16, 1
      %s159 = scalar_select %p158, %s16, 1
      %s160 = scalar_lea.vmem %s3, %s159
      %p161 = scmp.lt.s32.totalorder %s16, 1
      %s162 = scalar_select %p161, %s16, 1
      %s163 = smul.addr %s162, 128
      %s164 = smul.addr %s163, 8
      %s165 = scalar_lea.vmem %s0, %s164
      %p166 = scmp.lt.s32.totalorder %s16, 1
      %s167 = scalar_select %p166, %s16, 1
      %s168 = scalar_lea.vmem %s3, %s167
      %v169 = vld [vmem:[%s165] sm:$0xff]
      %v170 = vld [vmem:[%s165 + $0x8] sm:$0xff]
      %v171 = vld [vmem:[%s165 + $0x10] sm:$0xff]
      %v172 = vld [vmem:[%s165 + $0x18] sm:$0xff]
      %v173 = vld [vmem:[%s165 + $0x20] sm:$0xff]
      %v174 = vld [vmem:[%s165 + $0x28] sm:$0xff]
      %v175 = vld [vmem:[%s165 + $0x30] sm:$0xff]
      %v176 = vld [vmem:[%s165 + $0x38] sm:$0xff]
      %v177 = vld [vmem:[%s165 + $0x40] sm:$0xff]
      %v178 = vld [vmem:[%s165 + $0x48] sm:$0xff]
      %v179 = vld [vmem:[%s165 + $0x50] sm:$0xff]
      %v180 = vld [vmem:[%s165 + $0x58] sm:$0xff]
      %v181 = vld [vmem:[%s165 + $0x60] sm:$0xff]
      %v182 = vld [vmem:[%s165 + $0x68] sm:$0xff]
      %v183 = vld [vmem:[%s165 + $0x70] sm:$0xff]
      %v184 = vld [vmem:[%s165 + $0x78] sm:$0xff]
      %v185 = vld [vmem:[%s165 + $0x80] sm:$0xff]
      %v186 = vld [vmem:[%s165 + $0x88] sm:$0xff]
      %v187 = vld [vmem:[%s165 + $0x90] sm:$0xff]
      %v188 = vld [vmem:[%s165 + $0x98] sm:$0xff]
      %v189 = vld [vmem:[%s165 + $0xa0] sm:$0xff]
      %v190 = vld [vmem:[%s165 + $0xa8] sm:$0xff]
      %v191 = vld [vmem:[%s165 + $0xb0] sm:$0xff]
      %v192 = vld [vmem:[%s165 + $0xb8] sm:$0xff]
      %v193 = vld [vmem:[%s165 + $0xc0] sm:$0xff]
      %v194 = vld [vmem:[%s165 + $0xc8] sm:$0xff]
      %v195 = vld [vmem:[%s165 + $0xd0] sm:$0xff]
      %v196 = vld [vmem:[%s165 + $0xd8] sm:$0xff]
      %v197 = vld [vmem:[%s165 + $0xe0] sm:$0xff]
      %v198 = vld [vmem:[%s165 + $0xe8] sm:$0xff]
      %v199 = vld [vmem:[%s165 + $0xf0] sm:$0xff]
      %v200 = vld [vmem:[%s165 + $0xf8] sm:$0xff]
      %v201 = vld [vmem:[%s165 + $0x100] sm:$0xff]
      %v202 = vld [vmem:[%s165 + $0x108] sm:$0xff]
      %v203 = vld [vmem:[%s165 + $0x110] sm:$0xff]
      %v204 = vld [vmem:[%s165 + $0x118] sm:$0xff]
      %v205 = vld [vmem:[%s165 + $0x120] sm:$0xff]
      %v206 = vld [vmem:[%s165 + $0x128] sm:$0xff]
      %v207 = vld [vmem:[%s165 + $0x130] sm:$0xff]
      %v208 = vld [vmem:[%s165 + $0x138] sm:$0xff]
      %v209 = vld [vmem:[%s165 + $0x140] sm:$0xff]
      %v210 = vld [vmem:[%s165 + $0x148] sm:$0xff]
      %v211 = vld [vmem:[%s165 + $0x150] sm:$0xff]
      %v212 = vld [vmem:[%s165 + $0x158] sm:$0xff]
      %v213 = vld [vmem:[%s165 + $0x160] sm:$0xff]
      %v214 = vld [vmem:[%s165 + $0x168] sm:$0xff]
      %v215 = vld [vmem:[%s165 + $0x170] sm:$0xff]
      %v216 = vld [vmem:[%s165 + $0x178] sm:$0xff]
      %v217 = vld [vmem:[%s165 + $0x180] sm:$0xff]
      %v218 = vld [vmem:[%s165 + $0x188] sm:$0xff]
      %v219 = vld [vmem:[%s165 + $0x190] sm:$0xff]
      %v220 = vld [vmem:[%s165 + $0x198] sm:$0xff]
      %v221 = vld [vmem:[%s165 + $0x1a0] sm:$0xff]
      %v222 = vld [vmem:[%s165 + $0x1a8] sm:$0xff]
      %v223 = vld [vmem:[%s165 + $0x1b0] sm:$0xff]
      %v224 = vld [vmem:[%s165 + $0x1b8] sm:$0xff]
      %v225 = vld [vmem:[%s165 + $0x1c0] sm:$0xff]
      %v226 = vld [vmem:[%s165 + $0x1c8] sm:$0xff]
      %v227 = vld [vmem:[%s165 + $0x1d0] sm:$0xff]
      %v228 = vld [vmem:[%s165 + $0x1d8] sm:$0xff]
      %v229 = vld [vmem:[%s165 + $0x1e0] sm:$0xff]
      %v230 = vld [vmem:[%s165 + $0x1e8] sm:$0xff]
      %v231 = vld [vmem:[%s165 + $0x1f0] sm:$0xff]
      %v232 = vld [vmem:[%s165 + $0x1f8] sm:$0xff]
      %v233 = vld [vmem:[%s165 + $0x200] sm:$0xff]
      %v234 = vld [vmem:[%s165 + $0x208] sm:$0xff]
      %v235 = vld [vmem:[%s165 + $0x210] sm:$0xff]
      %v236 = vld [vmem:[%s165 + $0x218] sm:$0xff]
      %v237 = vld [vmem:[%s165 + $0x220] sm:$0xff]
      %v238 = vld [vmem:[%s165 + $0x228] sm:$0xff]
      %v239 = vld [vmem:[%s165 + $0x230] sm:$0xff]
      %v240 = vld [vmem:[%s165 + $0x238] sm:$0xff]
      %v241 = vld [vmem:[%s165 + $0x240] sm:$0xff]
      %v242 = vld [vmem:[%s165 + $0x248] sm:$0xff]
      %v243 = vld [vmem:[%s165 + $0x250] sm:$0xff]
      %v244 = vld [vmem:[%s165 + $0x258] sm:$0xff]
      %v245 = vld [vmem:[%s165 + $0x260] sm:$0xff]
      %v246 = vld [vmem:[%s165 + $0x268] sm:$0xff]
      %v247 = vld [vmem:[%s165 + $0x270] sm:$0xff]
      %v248 = vld [vmem:[%s165 + $0x278] sm:$0xff]
      %v249 = vld [vmem:[%s165 + $0x280] sm:$0xff]
      %v250 = vld [vmem:[%s165 + $0x288] sm:$0xff]
      %v251 = vld [vmem:[%s165 + $0x290] sm:$0xff]
      %v252 = vld [vmem:[%s165 + $0x298] sm:$0xff]
      %v253 = vld [vmem:[%s165 + $0x2a0] sm:$0xff]
      %v254 = vld [vmem:[%s165 + $0x2a8] sm:$0xff]
      %v255 = vld [vmem:[%s165 + $0x2b0] sm:$0xff]
      %v256 = vld [vmem:[%s165 + $0x2b8] sm:$0xff]
      %v257 = vld [vmem:[%s165 + $0x2c0] sm:$0xff]
      %v258 = vld [vmem:[%s165 + $0x2c8] sm:$0xff]
      %v259 = vld [vmem:[%s165 + $0x2d0] sm:$0xff]
      %v260 = vld [vmem:[%s165 + $0x2d8] sm:$0xff]
      %v261 = vld [vmem:[%s165 + $0x2e0] sm:$0xff]
      %v262 = vld [vmem:[%s165 + $0x2e8] sm:$0xff]
      %v263 = vld [vmem:[%s165 + $0x2f0] sm:$0xff]
      %v264 = vld [vmem:[%s165 + $0x2f8] sm:$0xff]
      %v265 = vld [vmem:[%s165 + $0x300] sm:$0xff]
      %v266 = vld [vmem:[%s165 + $0x308] sm:$0xff]
      %v267 = vld [vmem:[%s165 + $0x310] sm:$0xff]
      %v268 = vld [vmem:[%s165 + $0x318] sm:$0xff]
      %v269 = vld [vmem:[%s165 + $0x320] sm:$0xff]
      %v270 = vld [vmem:[%s165 + $0x328] sm:$0xff]
      %v271 = vld [vmem:[%s165 + $0x330] sm:$0xff]
      %v272 = vld [vmem:[%s165 + $0x338] sm:$0xff]
      %v273 = vld [vmem:[%s165 + $0x340] sm:$0xff]
      %v274 = vld [vmem:[%s165 + $0x348] sm:$0xff]
      %v275 = vld [vmem:[%s165 + $0x350] sm:$0xff]
      %v276 = vld [vmem:[%s165 + $0x358] sm:$0xff]
      %v277 = vld [vmem:[%s165 + $0x360] sm:$0xff]
      %v278 = vld [vmem:[%s165 + $0x368] sm:$0xff]
      %v279 = vld [vmem:[%s165 + $0x370] sm:$0xff]
      %v280 = vld [vmem:[%s165 + $0x378] sm:$0xff]
      %v281 = vld [vmem:[%s165 + $0x380] sm:$0xff]
      %v282 = vld [vmem:[%s165 + $0x388] sm:$0xff]
      %v283 = vld [vmem:[%s165 + $0x390] sm:$0xff]
      %v284 = vld [vmem:[%s165 + $0x398] sm:$0xff]
      %v285 = vld [vmem:[%s165 + $0x3a0] sm:$0xff]
      %v286 = vld [vmem:[%s165 + $0x3a8] sm:$0xff]
      %v287 = vld [vmem:[%s165 + $0x3b0] sm:$0xff]
      %v288 = vld [vmem:[%s165 + $0x3b8] sm:$0xff]
      %v289 = vld [vmem:[%s165 + $0x3c0] sm:$0xff]
      %v290 = vld [vmem:[%s165 + $0x3c8] sm:$0xff]
      %v291 = vld [vmem:[%s165 + $0x3d0] sm:$0xff]
      %v292 = vld [vmem:[%s165 + $0x3d8] sm:$0xff]
      %v293 = vld [vmem:[%s165 + $0x3e0] sm:$0xff]
      %v294 = vld [vmem:[%s165 + $0x3e8] sm:$0xff]
      %v295 = vld [vmem:[%s165 + $0x3f0] sm:$0xff]
      %v296 = vld [vmem:[%s165 + $0x3f8] sm:$0xff]
      %v297 = vld [vmem:[%s1] sm:$0xff]
      %v298 = vld [vmem:[#allocation2] sm:$0x1]
      %300 = vset.pattern.permute.xlu0 0
      %301 = vperm.xlu0 %300, %v298
      %v302 = vpop.permute.xlu0 %301
      %v304 = vlaneseq
      %v305 = vshrl.u32 %v304, 7
      %v306 = vsub.s32 0, %v305
      %v307 = vrot.slane %v302, %v306
      %v309 = vlaneseq
      %v310 = vshrl.u32 %v309, 7
      %v311 = vsub.s32 0, %v310
      %v312 = vrot.slane %v297, %v311
      %v313 = vlaneseq
      %v314 = vshrl.u32 %v313, 7
      %v315 = vsub.s32 1, %v314
      %v316 = vrot.slane %v297, %v315
      %v317 = vlaneseq
      %v318 = vshrl.u32 %v317, 7
      %v319 = vsub.s32 2, %v318
      %v320 = vrot.slane %v297, %v319
      %v321 = vlaneseq
      %v322 = vshrl.u32 %v321, 7
      %v323 = vsub.s32 3, %v322
      %v324 = vrot.slane %v297, %v323
      %v325 = vlaneseq
      %v326 = vshrl.u32 %v325, 7
      %v327 = vsub.s32 4, %v326
      %v328 = vrot.slane %v297, %v327
      %v329 = vlaneseq
      %v330 = vshrl.u32 %v329, 7
      %v331 = vsub.s32 5, %v330
      %v332 = vrot.slane %v297, %v331
      %v333 = vlaneseq
      %v334 = vshrl.u32 %v333, 7
      %v335 = vsub.s32 6, %v334
      %v336 = vrot.slane %v297, %v335
      %v337 = vlaneseq
      %v338 = vshrl.u32 %v337, 7
      %v339 = vsub.s32 7, %v338
      %v340 = vrot.slane %v297, %v339
      %349 = vmatprep.subr.mxu0 0.0
      %350 = vmatpush1.msra.mxu0 %v169
      %351 = vmatprep.subr.mxu0 0.0
      %352 = vmatpush1.msra.mxu0 %v170
      %353 = vmatprep.subr.mxu0 0.0
      %354 = vmatpush1.msra.mxu0 %v171
      %355 = vmatprep.subr.mxu0 0.0
      %356 = vmatpush1.msra.mxu0 %v172
      %357 = vmatprep.subr.mxu0 0.0
      %358 = vmatpush1.msra.mxu0 %v173
      %359 = vmatprep.subr.mxu0 0.0
      %360 = vmatpush1.msra.mxu0 %v174
      %361 = vmatprep.subr.mxu0 0.0
      %362 = vmatpush1.msra.mxu0 %v175
      %363 = vmatprep.subr.mxu0 0.0
      %364 = vmatpush1.msra.mxu0 %v176
      %365 = vmatprep.subr.mxu0 0.0
      %366 = vmatpush1.msra.mxu0 %v177
      %367 = vmatprep.subr.mxu0 0.0
      %368 = vmatpush1.msra.mxu0 %v178
      %369 = vmatprep.subr.mxu0 0.0
      %370 = vmatpush1.msra.mxu0 %v179
      %371 = vmatprep.subr.mxu0 0.0
      %372 = vmatpush1.msra.mxu0 %v180
      %373 = vmatprep.subr.mxu0 0.0
      %374 = vmatpush1.msra.mxu0 %v181
      %375 = vmatprep.subr.mxu0 0.0
      %376 = vmatpush1.msra.mxu0 %v182
      %377 = vmatprep.subr.mxu0 0.0
      %378 = vmatpush1.msra.mxu0 %v183
      %379 = vmatprep.subr.mxu0 0.0
      %380 = vmatpush1.msra.mxu0 %v184
      %381 = vmatprep.subr.mxu0 0.0
      %382 = vmatpush1.msra.mxu0 %v185
      %383 = vmatprep.subr.mxu0 0.0
      %384 = vmatpush1.msra.mxu0 %v186
      %385 = vmatprep.subr.mxu0 0.0
      %386 = vmatpush1.msra.mxu0 %v187
      %387 = vmatprep.subr.mxu0 0.0
      %388 = vmatpush1.msra.mxu0 %v188
      %389 = vmatprep.subr.mxu0 0.0
      %390 = vmatpush1.msra.mxu0 %v189
      %391 = vmatprep.subr.mxu0 0.0
      %392 = vmatpush1.msra.mxu0 %v190
      %393 = vmatprep.subr.mxu0 0.0
      %394 = vmatpush1.msra.mxu0 %v191
      %395 = vmatprep.subr.mxu0 0.0
      %396 = vmatpush1.msra.mxu0 %v192
      %397 = vmatprep.subr.mxu0 0.0
      %398 = vmatpush1.msra.mxu0 %v193
      %399 = vmatprep.subr.mxu0 0.0
      %400 = vmatpush1.msra.mxu0 %v194
      %401 = vmatprep.subr.mxu0 0.0
      %402 = vmatpush1.msra.mxu0 %v195
      %403 = vmatprep.subr.mxu0 0.0
      %404 = vmatpush1.msra.mxu0 %v196
      %405 = vmatprep.subr.mxu0 0.0
      %406 = vmatpush1.msra.mxu0 %v197
      %407 = vmatprep.subr.mxu0 0.0
      %408 = vmatpush1.msra.mxu0 %v198
      %409 = vmatprep.subr.mxu0 0.0
      %410 = vmatpush1.msra.mxu0 %v199
      %411 = vmatprep.subr.mxu0 0.0
      %412 = vmatpush1.msra.mxu0 %v200
      %413 = vmatprep.mubr.f32.mxu0 %v316
      %414 = vmatmul.mubr.f32.gmra.mrb[0].mxu0 %v312
      %v415 = vpop.f32.mrb[0].mxu0
      %v416 = vadd.f32 %v307, %v415
      %v417 = vpop.f32.mrb[0].mxu0
      %418 = vdwg.mxu0
      %419 = vmatprep.subr.mxu0 0.0
      %420 = vmatpush1.msra.mxu0 %v201
      %421 = vmatprep.subr.mxu0 0.0
      %422 = vmatpush1.msra.mxu0 %v202
      %423 = vmatprep.subr.mxu0 0.0
      %424 = vmatpush1.msra.mxu0 %v203
      %425 = vmatprep.subr.mxu0 0.0
      %426 = vmatpush1.msra.mxu0 %v204
      %427 = vmatprep.subr.mxu0 0.0
      %428 = vmatpush1.msra.mxu0 %v205
      %429 = vmatprep.subr.mxu0 0.0
      %430 = vmatpush1.msra.mxu0 %v206
      %431 = vmatprep.subr.mxu0 0.0
      %432 = vmatpush1.msra.mxu0 %v207
      %433 = vmatprep.subr.mxu0 0.0
      %434 = vmatpush1.msra.mxu0 %v208
      %435 = vmatprep.subr.mxu0 0.0
      %436 = vmatpush1.msra.mxu0 %v209
      %437 = vmatprep.subr.mxu0 0.0
      %438 = vmatpush1.msra.mxu0 %v210
      %439 = vmatprep.subr.mxu0 0.0
      %440 = vmatpush1.msra.mxu0 %v211
      %441 = vmatprep.subr.mxu0 0.0
      %442 = vmatpush1.msra.mxu0 %v212
      %443 = vmatprep.subr.mxu0 0.0
      %444 = vmatpush1.msra.mxu0 %v213
      %445 = vmatprep.subr.mxu0 0.0
      %446 = vmatpush1.msra.mxu0 %v214
      %447 = vmatprep.subr.mxu0 0.0
      %448 = vmatpush1.msra.mxu0 %v215
      %449 = vmatprep.subr.mxu0 0.0
      %450 = vmatpush1.msra.mxu0 %v216
      %451 = vmatprep.subr.mxu0 0.0
      %452 = vmatpush1.msra.mxu0 %v217
      %453 = vmatprep.subr.mxu0 0.0
      %454 = vmatpush1.msra.mxu0 %v218
      %455 = vmatprep.subr.mxu0 0.0
      %456 = vmatpush1.msra.mxu0 %v219
      %457 = vmatprep.subr.mxu0 0.0
      %458 = vmatpush1.msra.mxu0 %v220
      %459 = vmatprep.subr.mxu0 0.0
      %460 = vmatpush1.msra.mxu0 %v221
      %461 = vmatprep.subr.mxu0 0.0
      %462 = vmatpush1.msra.mxu0 %v222
      %463 = vmatprep.subr.mxu0 0.0
      %464 = vmatpush1.msra.mxu0 %v223
      %465 = vmatprep.subr.mxu0 0.0
      %466 = vmatpush1.msra.mxu0 %v224
      %467 = vmatprep.subr.mxu0 0.0
      %468 = vmatpush1.msra.mxu0 %v225
      %469 = vmatprep.subr.mxu0 0.0
      %470 = vmatpush1.msra.mxu0 %v226
      %471 = vmatprep.subr.mxu0 0.0
      %472 = vmatpush1.msra.mxu0 %v227
      %473 = vmatprep.subr.mxu0 0.0
      %474 = vmatpush1.msra.mxu0 %v228
      %475 = vmatprep.subr.mxu0 0.0
      %476 = vmatpush1.msra.mxu0 %v229
      %477 = vmatprep.subr.mxu0 0.0
      %478 = vmatpush1.msra.mxu0 %v230
      %479 = vmatprep.subr.mxu0 0.0
      %480 = vmatpush1.msra.mxu0 %v231
      %481 = vmatprep.subr.mxu0 0.0
      %482 = vmatpush1.msra.mxu0 %v232
      %483 = vmatprep.mubr.f32.mxu0 %v324
      %484 = vmatmul.mubr.f32.gmra.mrb[0].mxu0 %v320
      %v485 = vpop.f32.mrb[0].mxu0
      %v486 = vadd.f32 %v416, %v485
      %v487 = vpop.f32.mrb[0].mxu0
      %488 = vdwg.mxu0
      %489 = vmatprep.subr.mxu0 0.0
      %490 = vmatpush1.msra.mxu0 %v233
      %491 = vmatprep.subr.mxu0 0.0
      %492 = vmatpush1.msra.mxu0 %v234
      %493 = vmatprep.subr.mxu0 0.0
      %494 = vmatpush1.msra.mxu0 %v235
      %495 = vmatprep.subr.mxu0 0.0
      %496 = vmatpush1.msra.mxu0 %v236
      %497 = vmatprep.subr.mxu0 0.0
      %498 = vmatpush1.msra.mxu0 %v237
      %499 = vmatprep.subr.mxu0 0.0
      %500 = vmatpush1.msra.mxu0 %v238
      %501 = vmatprep.subr.mxu0 0.0
      %502 = vmatpush1.msra.mxu0 %v239
      %503 = vmatprep.subr.mxu0 0.0
      %504 = vmatpush1.msra.mxu0 %v240
      %505 = vmatprep.subr.mxu0 0.0
      %506 = vmatpush1.msra.mxu0 %v241
      %507 = vmatprep.subr.mxu0 0.0
      %508 = vmatpush1.msra.mxu0 %v242
      %509 = vmatprep.subr.mxu0 0.0
      %510 = vmatpush1.msra.mxu0 %v243
      %511 = vmatprep.subr.mxu0 0.0
      %512 = vmatpush1.msra.mxu0 %v244
      %513 = vmatprep.subr.mxu0 0.0
      %514 = vmatpush1.msra.mxu0 %v245
      %515 = vmatprep.subr.mxu0 0.0
      %516 = vmatpush1.msra.mxu0 %v246
      %517 = vmatprep.subr.mxu0 0.0
      %518 = vmatpush1.msra.mxu0 %v247
      %519 = vmatprep.subr.mxu0 0.0
      %520 = vmatpush1.msra.mxu0 %v248
      %521 = vmatprep.subr.mxu0 0.0
      %522 = vmatpush1.msra.mxu0 %v249
      %523 = vmatprep.subr.mxu0 0.0
      %524 = vmatpush1.msra.mxu0 %v250
      %525 = vmatprep.subr.mxu0 0.0
      %526 = vmatpush1.msra.mxu0 %v251
      %527 = vmatprep.subr.mxu0 0.0
      %528 = vmatpush1.msra.mxu0 %v252
      %529 = vmatprep.subr.mxu0 0.0
      %530 = vmatpush1.msra.mxu0 %v253
      %531 = vmatprep.subr.mxu0 0.0
      %532 = vmatpush1.msra.mxu0 %v254
      %533 = vmatprep.subr.mxu0 0.0
      %534 = vmatpush1.msra.mxu0 %v255
      %535 = vmatprep.subr.mxu0 0.0
      %536 = vmatpush1.msra.mxu0 %v256
      %537 = vmatprep.subr.mxu0 0.0
      %538 = vmatpush1.msra.mxu0 %v257
      %539 = vmatprep.subr.mxu0 0.0
      %540 = vmatpush1.msra.mxu0 %v258
      %541 = vmatprep.subr.mxu0 0.0
      %542 = vmatpush1.msra.mxu0 %v259
      %543 = vmatprep.subr.mxu0 0.0
      %544 = vmatpush1.msra.mxu0 %v260
      %545 = vmatprep.subr.mxu0 0.0
      %546 = vmatpush1.msra.mxu0 %v261
      %547 = vmatprep.subr.mxu0 0.0
      %548 = vmatpush1.msra.mxu0 %v262
      %549 = vmatprep.subr.mxu0 0.0
      %550 = vmatpush1.msra.mxu0 %v263
      %551 = vmatprep.subr.mxu0 0.0
      %552 = vmatpush1.msra.mxu0 %v264
      %553 = vmatprep.mubr.f32.mxu0 %v332
      %554 = vmatmul.mubr.f32.gmra.mrb[0].mxu0 %v328
      %v555 = vpop.f32.mrb[0].mxu0
      %v556 = vadd.f32 %v486, %v555
      %v557 = vpop.f32.mrb[0].mxu0
      %558 = vdwg.mxu0
      %559 = vmatprep.subr.mxu0 0.0
      %560 = vmatpush1.msra.mxu0 %v265
      %561 = vmatprep.subr.mxu0 0.0
      %562 = vmatpush1.msra.mxu0 %v266
      %563 = vmatprep.subr.mxu0 0.0
      %564 = vmatpush1.msra.mxu0 %v267
      %565 = vmatprep.subr.mxu0 0.0
      %566 = vmatpush1.msra.mxu0 %v268
      %567 = vmatprep.subr.mxu0 0.0
      %568 = vmatpush1.msra.mxu0 %v269
      %569 = vmatprep.subr.mxu0 0.0
      %570 = vmatpush1.msra.mxu0 %v270
      %571 = vmatprep.subr.mxu0 0.0
      %572 = vmatpush1.msra.mxu0 %v271
      %573 = vmatprep.subr.mxu0 0.0
      %574 = vmatpush1.msra.mxu0 %v272
      %575 = vmatprep.subr.mxu0 0.0
      %576 = vmatpush1.msra.mxu0 %v273
      %577 = vmatprep.subr.mxu0 0.0
      %578 = vmatpush1.msra.mxu0 %v274
      %579 = vmatprep.subr.mxu0 0.0
      %580 = vmatpush1.msra.mxu0 %v275
      %581 = vmatprep.subr.mxu0 0.0
      %582 = vmatpush1.msra.mxu0 %v276
      %583 = vmatprep.subr.mxu0 0.0
      %584 = vmatpush1.msra.mxu0 %v277
      %585 = vmatprep.subr.mxu0 0.0
      %586 = vmatpush1.msra.mxu0 %v278
      %587 = vmatprep.subr.mxu0 0.0
      %588 = vmatpush1.msra.mxu0 %v279
      %589 = vmatprep.subr.mxu0 0.0
      %590 = vmatpush1.msra.mxu0 %v280
      %591 = vmatprep.subr.mxu0 0.0
      %592 = vmatpush1.msra.mxu0 %v281
      %593 = vmatprep.subr.mxu0 0.0
      %594 = vmatpush1.msra.mxu0 %v282
      %595 = vmatprep.subr.mxu0 0.0
      %596 = vmatpush1.msra.mxu0 %v283
      %597 = vmatprep.subr.mxu0 0.0
      %598 = vmatpush1.msra.mxu0 %v284
      %599 = vmatprep.subr.mxu0 0.0
      %600 = vmatpush1.msra.mxu0 %v285
      %601 = vmatprep.subr.mxu0 0.0
      %602 = vmatpush1.msra.mxu0 %v286
      %603 = vmatprep.subr.mxu0 0.0
      %604 = vmatpush1.msra.mxu0 %v287
      %605 = vmatprep.subr.mxu0 0.0
      %606 = vmatpush1.msra.mxu0 %v288
      %607 = vmatprep.subr.mxu0 0.0
      %608 = vmatpush1.msra.mxu0 %v289
      %609 = vmatprep.subr.mxu0 0.0
      %610 = vmatpush1.msra.mxu0 %v290
      %611 = vmatprep.subr.mxu0 0.0
      %612 = vmatpush1.msra.mxu0 %v291
      %613 = vmatprep.subr.mxu0 0.0
      %614 = vmatpush1.msra.mxu0 %v292
      %615 = vmatprep.subr.mxu0 0.0
      %616 = vmatpush1.msra.mxu0 %v293
      %617 = vmatprep.subr.mxu0 0.0
      %618 = vmatpush1.msra.mxu0 %v294
      %619 = vmatprep.subr.mxu0 0.0
      %620 = vmatpush1.msra.mxu0 %v295
      %621 = vmatprep.subr.mxu0 0.0
      %622 = vmatpush1.msra.mxu0 %v296
      %623 = vmatprep.mubr.f32.mxu0 %v340
      %624 = vmatmul.mubr.f32.gmra.mrb[0].mxu0 %v336
      %v625 = vpop.f32.mrb[0].mxu0
      %v626 = vadd.f32 %v556, %v625
      %v627 = vpop.f32.mrb[0].mxu0
      %628 = vdwg.mxu0
      %v629 = vxor.u32 %v626, 2147483648
      %v630 = vmul.f32 %v629, 1.442695
      %v631 = vpow.pop %v630
      %v632 = vadd.f32 %v631, 1.0
      %v633 = vrcp.pop %v632
      %v634 = vmul.f32 1.0, %v633
      %vm635 = vcmask 24576
      %636 = vst.msk [vmem:[%s168] sm:$0x1] %vm635, %v634
      %p637 = scmp.lt.s32.totalorder %s16, 1
      %s638 = scalar_select %p637, %s16, 1
      %s639 = scalar_lea.vmem %s3, %s638
      // Predicated region
      $region33: #{patchgan_discriminator.9} parent=31 // pred_check
        %p640 = pneg %p102
      $region34: #{patchgan_discriminator.9} parent=31 // pred_check_branch
        %642 = sbr.rel (%p640) target = $region36
      $region35: #{patchgan_discriminator.9} parent=31 // pred_region
        _
      $region36: #{patchgan_discriminator.9} parent=31 // pred_fallthru
        _
    $region32: #{patchgan_discriminator.9} parent=5 // pred_fallthru
      _
    %p643 = scmp.le.s32.totalorder 2, %s11
    // Predicated region
    $region37: #{patchgan_discriminator.9} parent=5 // pred_check
      %p644 = pneg %p643
    $region38: #{patchgan_discriminator.9} parent=5 // pred_check_branch
      %646 = sbr.rel (%p644) target = $region40
    $region39: #{patchgan_discriminator.9} parent=5 // pred_region
      %s647 = ssub.s32 %s11, 2
      // Predicated region
      $region41: #{patchgan_discriminator.9} parent=39 // pred_check
        %p648 = pneg %p108
      $region42: #{patchgan_discriminator.9} parent=39 // pred_check_branch
        %650 = sbr.rel (%p648) target = $region44
      $region43: #{patchgan_discriminator.9} parent=39 // pred_region
        %p651 = scmp.lt.s32.totalorder %s17, 1
        %s652 = scalar_select %p651, %s17, 1
        %s653 = scalar_lea.vmem %s3, %s652
      $region44: #{patchgan_discriminator.9} parent=39 // pred_fallthru
        _
    $region40: #{patchgan_discriminator.9} parent=5 // pred_fallthru
      _
  $region6: #{patchgan_discriminator.9} parent=0 // loop_footer
    %s15 = sadd.s32 1, %s11
  $region7: #{patchgan_discriminator.9} parent=0 // loop_footer_branch
    %10 = sbr.rel target = $region3
  $region8: #{patchgan_discriminator.9} parent=0 // loop_exit
    _

</llo_original>
